<compile_context>
chip_gen: v5e
topology: v5e:2x2
jax: 0.10.0
libtpu: 0.0.40
codegen_flags: <defaults>
</compile_context>

<pallas_src>
import numpy as np
import jax
import jax.numpy as jnp
from jax.experimental import pallas as pl
from jax.experimental.pallas import tpu as pltpu


def _round_up(x, m):
    return ((x + m - 1) // m) * m


def _make_kernel(num_fields, vpad, tile_b):
    def kernel(idx_ref, rhs_ref, out_ref):
        # idx_ref: (TB, F)        int32  global row indices (already offset + clamped)
        # rhs_ref: (F*Vpad, F*D)  f32    block-diagonal embedding table (VMEM resident)
        # out_ref: (TB, F*D)      f32    lane-dense output block
        idx = idx_ref[...]                                              # (TB, F)
        iota = jax.lax.broadcasted_iota(jnp.int32, (tile_b, vpad), 1)   # hoisted once
        parts = []
        for f in range(num_fields):                                     # static, F small
            parts.append((iota == idx[:, f:f + 1]).astype(jnp.float32))  # (TB, Vpad)
        one_hot = jnp.concatenate(parts, axis=1)                        # (TB, F*Vpad)
        out_ref[...] = jnp.dot(
            one_hot, rhs_ref[...],
            preferred_element_type=jnp.float32,
            precision=jax.lax.Precision.HIGHEST,   # exact f32 row selection
        ).astype(out_ref.dtype)

    return kernel


def features_embedding(x, offsets, table, *, tile_b=512):
    """x: (B, F) int, offsets: (F,) int32, table: (V, D) float32 -> (B, F, D)."""
    B, F = x.shape
    V, D = table.shape
    FD = F * D

    # Batch tile: multiple of 8 sublanes, at most the (8-rounded) batch, default 512.
    TB = min(int(tile_b), _round_up(B, 8))
    TB = max(8, (TB // 8) * 8)
    num_tiles = pl.cdiv(B, TB)
    Bp = num_tiles * TB

    # Pad the contraction (vocab) dim to the MXU width (128 covers v5e/v6e/v7x).
    Vpad = _round_up(V, 128)

    # Global row indices: offsets added and clamped ONCE in the wrapper (one fused XLA
    # vector op).  PyTorch's nn.Embedding would raise on OOB indices; here they are
    # clamped, which is benign for valid inputs.  Only this tiny int32 array is padded
    # to a whole number of tiles (padded rows gather row 0, then get masked on store).
    idx = jnp.clip(x.astype(jnp.int32) + offsets.astype(jnp.int32)[None, :], 0, V - 1)
    idx = jnp.pad(idx, ((0, Bp - B), (0, 0)))

    # Block-diagonal RHS (F*Vpad, F*D): diagonal block f is the zero-padded table, so a
    # (TB, F*Vpad) one-hot @ RHS lands directly in the lane-dense (TB, F*D) layout with
    # MXU N = F*D (=128 here) instead of N = D.
    table_pad = jnp.zeros((Vpad, D), table.dtype).at[:V, :].set(table)
    rhs = jnp.kron(jnp.eye(F, dtype=table.dtype), table_pad)          # (F*Vpad, F*D)

    # VMEM budget, accounting for lane padding of the last dim to 128.
    fd_lanes = _round_up(FD, 128)
    rhs_bytes = F * Vpad * fd_lanes * 4                 # resident, single copy
    idx_block = TB * _round_up(F, 128) * 4              # int32 block, lane padded
    out_block = TB * fd_lanes * 4
    onehot_bytes = TB * F * Vpad * 4                    # in-kernel temporary
    vmem_needed = rhs_bytes + 2 * (idx_block + out_block) + onehot_bytes + (4 << 20)
    # TODO(synk): if rhs_bytes exceeds ~48 MiB (v7x 64 MiB VMEM ceiling), fall back to an
    # HBM-resident table (memory_space=pl.ANY) with a V-tiled one-hot matmul / DMA gather.
    vmem_limit = int(min(max(vmem_needed, 16 << 20), 100 << 20))

    grid_spec = pltpu.PrefetchScalarGridSpec(
        num_scalar_prefetch=0,
        grid=(num_tiles,),
        in_specs=[
            pl.BlockSpec((TB, F), lambda t: (t, 0)),                # indices, pipelined
            pl.BlockSpec(memory_space=pltpu.MemorySpace.VMEM),      # table, whole resident
        ],
        out_specs=pl.BlockSpec((TB, FD), lambda t: (t, 0)),
    )

    out = pl.pallas_call(
        _make_kernel(F, Vpad, TB),
        grid_spec=grid_spec,
        out_shape=jax.ShapeDtypeStruct((B, FD), table.dtype),
        compiler_params=pltpu.CompilerParams(
            dimension_semantics=("parallel",),   # independent batch tiles (2 TCs on v7x)
            vmem_limit_bytes=vmem_limit,
        ),
    )(idx, rhs)

    return out.reshape(B, F, D)


if __name__ == "__main__":
    key = jax.random.PRNGKey(0)

    # Module config (synthetic, deterministic, small)
    field_dims = np.array([10, 20, 30, 40], dtype=np.int64)
    embed_dim = 32
    num_fields = len(field_dims)
    vocab = int(field_dims.sum())
    batch = 10   # not a multiple of 8: exercises the masked tail output block

    # offsets = (0, cumsum(field_dims)[:-1])
    offsets = jnp.asarray(
        np.array((0, *np.cumsum(field_dims)[:-1]), dtype=np.int32))

    # Embedding weight with xavier_uniform init (fan_in=vocab, fan_out=embed_dim)
    k_w, k_x = jax.random.split(key)
    bound = float(np.sqrt(6.0 / (vocab + embed_dim)))
    table = jax.random.uniform(
        k_w, (vocab, embed_dim), dtype=jnp.float32, minval=-bound, maxval=bound)

    # Per-field indices: column f in [0, field_dims[f])
    cols = []
    for f in range(num_fields):
        k_x, k_f = jax.random.split(k_x)
        cols.append(jax.random.randint(
            k_f, (batch, 1), 0, int(field_dims[f]), dtype=jnp.int32))
    x = jnp.concatenate(cols, axis=1)  # (batch, num_fields) int32

    out = features_embedding(x, offsets, table)
    out = jax.block_until_ready(out)

    # Reference (plain JAX) check
    ref = jnp.take(table, x + offsets[None, :], axis=0)
    assert out.shape == (batch, num_fields, embed_dim)
    err = float(jnp.max(jnp.abs(out - ref)))
    assert jnp.allclose(out, ref, rtol=0.0, atol=2e-3), err

    print("KERNEL_OK")
</pallas_src>

<mosaic_0001>
module attributes {stable_mosaic.version = 11 : i64} {
  func.func @kernel(%arg0: i32, %arg1: memref<16x4xi32, #tpu.memory_space<vmem>>, %arg2: memref<512x128xf32, #tpu.memory_space<vmem>>, %arg3: memref<16x128xf32, #tpu.memory_space<vmem>>) attributes {dimension_semantics = [#tpu.dimension_semantics<parallel>], iteration_bounds = array<i64: 1>, scalar_prefetch = 0 : i64, scratch_operands = 0 : i64, tpu.core_type = #tpu.core_type<tc>, window_params = [{transform_indices = @transform_0, window_bounds = array<i64: 16, 4>}, {pipeline_mode = #tpu.pipeline_mode<synchronous>, transform_indices = @transform_1, window_bounds = array<i64: 512, 128>}, {transform_indices = @transform_2, window_bounds = array<i64: 16, 128>}]} {
    %c0 = arith.constant 0 : index
    %c0_0 = arith.constant 0 : index
    %0 = vector.load %arg1[%c0, %c0_0] : memref<16x4xi32, #tpu.memory_space<vmem>>, vector<16x4xi32>
    %1 = tpu.iota {dimensions = array<i32: 1>} : vector<16x128xi32>
    %2 = vector.extract_strided_slice %0 {offsets = [0, 0], sizes = [16, 1], strides = [1, 1]} : vector<16x4xi32> to vector<16x1xi32>
    %3 = vector.broadcast %2 : vector<16x1xi32> to vector<16x128xi32>
    %4 = arith.cmpi eq, %1, %3 : vector<16x128xi32>
    %5 = arith.extui %4 : vector<16x128xi1> to vector<16x128xi32>
    %6 = arith.sitofp %5 : vector<16x128xi32> to vector<16x128xf32>
    %7 = vector.extract_strided_slice %0 {offsets = [0, 1], sizes = [16, 1], strides = [1, 1]} : vector<16x4xi32> to vector<16x1xi32>
    %8 = vector.broadcast %7 : vector<16x1xi32> to vector<16x128xi32>
    %9 = arith.cmpi eq, %1, %8 : vector<16x128xi32>
    %10 = arith.extui %9 : vector<16x128xi1> to vector<16x128xi32>
    %11 = arith.sitofp %10 : vector<16x128xi32> to vector<16x128xf32>
    %12 = vector.extract_strided_slice %0 {offsets = [0, 2], sizes = [16, 1], strides = [1, 1]} : vector<16x4xi32> to vector<16x1xi32>
    %13 = vector.broadcast %12 : vector<16x1xi32> to vector<16x128xi32>
    %14 = arith.cmpi eq, %1, %13 : vector<16x128xi32>
    %15 = arith.extui %14 : vector<16x128xi1> to vector<16x128xi32>
    %16 = arith.sitofp %15 : vector<16x128xi32> to vector<16x128xf32>
    %17 = vector.extract_strided_slice %0 {offsets = [0, 3], sizes = [16, 1], strides = [1, 1]} : vector<16x4xi32> to vector<16x1xi32>
    %18 = vector.broadcast %17 : vector<16x1xi32> to vector<16x128xi32>
    %19 = arith.cmpi eq, %1, %18 : vector<16x128xi32>
    %20 = arith.extui %19 : vector<16x128xi1> to vector<16x128xi32>
    %21 = arith.sitofp %20 : vector<16x128xi32> to vector<16x128xf32>
    %22 = tpu.concatenate %6, %11, %16, %21 in 1 : vector<16x128xf32>, vector<16x128xf32>, vector<16x128xf32>, vector<16x128xf32> -> vector<16x512xf32>
    %c0_1 = arith.constant 0 : index
    %c0_2 = arith.constant 0 : index
    %23 = vector.load %arg2[%c0_1, %c0_2] : memref<512x128xf32, #tpu.memory_space<vmem>>, vector<512x128xf32>
    %cst = arith.constant dense<0.000000e+00> : vector<16x128xf32>
    %24 = tpu.matmul %22, %23, %cst {dimension_numbers = #tpu.dot_dimension_numbers<[1], [0], [0], [1], [0, 0, 1, 1], [], []>, precision = #tpu.contract_precision<fp32>} : vector<16x512xf32>, vector<512x128xf32>, vector<16x128xf32> -> vector<16x128xf32>
    %c0_3 = arith.constant 0 : index
    %c0_4 = arith.constant 0 : index
    %25 = vector.load %arg3[%c0_3, %c0_4] : memref<16x128xf32, #tpu.memory_space<vmem>>, vector<16x128xf32>
    tpu.vector_store %arg3[%c0_3, %c0_4], %24 {strides = array<i32>} : memref<16x128xf32, #tpu.memory_space<vmem>>, vector<16x128xf32>,
    return
  }
  func.func @transform_0(%arg0: i32) -> (i32, i32) {
    %c0_i32 = arith.constant 0 : i32
    %c0_i32_0 = arith.constant 0 : i32
    return %arg0, %c0_i32 : i32, i32
  }
  func.func @transform_1(%arg0: i32) -> (i32, i32) {
    %c0_i32 = arith.constant 0 : i32
    %c0_i32_0 = arith.constant 0 : i32
    %c0_i32_1 = arith.constant 0 : i32
    return %c0_i32, %c0_i32_0 : i32, i32
  }
  func.func @transform_2(%arg0: i32) -> (i32, i32) {
    %c0_i32 = arith.constant 0 : i32
    %c0_i32_0 = arith.constant 0 : i32
    return %arg0, %c0_i32 : i32, i32
  }
}

</mosaic_0001>

<llo_original>
// kernel: tpu_custom_call.1
$region0: #{tpu_custom_call.1}
  #allocation0 [shape = 'u32[]', space=smem, size = 0x4, offset = 0x4, fixed_abs, tag = 'smem constant byte address 0x4 - core index']
  #allocation1 [shape = 'u32[72,128]{1,0:T(1,128)}', space=vmem, size = 0x9000, scoped, tag = 'internal scratch']
  %s0 = inlined_call_operand.vmem [shape: s32[16,4], index: 0, kind: input, shape index: {}]
  %s1 = inlined_call_operand.hbm [shape: f32[512,128], index: 1, kind: input, shape index: {}]
  %s2 = inlined_call_operand.hbm [shape: f32[10,128], index: 2, kind: output, shape index: {}]
  %s3 = sld [smem:[#allocation0]]
  $region22: #{tpu_custom_call.1} parent=0
    _
  %s5 = ssub.s32 1, %s3
  %s6 = scalar_select 0, %s5, %s3
  $region1: #{tpu_custom_call.1} parent=0
    #allocation2 [shape = 'u8[262144]{0}', space=vmem, size = 0x40000, scoped, tag = 'input window, operand 1, single buffered']
    #allocation3 [shape = 's32[1]{0}', space=sflag, size = 0x4, scoped, tag = 'scoped memory for tpu_custom_call.1']
    #allocation4 [shape = 's32[1]{0}', space=sflag, size = 0x4, scoped, tag = 'scoped memory for tpu_custom_call.1']
    #allocation5 [shape = 'u8[8192]{0}', space=vmem, size = 0x2000, scoped, tag = 'output window, operand 0, single buffered']
    %7 = vsyncpa [#allocation3], 0
    %8 = vsyncpa [#allocation4], 0
    // Predicated region
    $region2: #{tpu_custom_call.1} parent=1 // pred_check
      _
    $region3: #{tpu_custom_call.1} parent=1 // pred_check_branch
      %10 = sbr.rel (0) target = $region5
    $region4: #{tpu_custom_call.1} parent=1 // pred_region
      _
    $region5: #{tpu_custom_call.1} parent=1 // pred_fallthru
      _
    // Predicated region
    $region6: #{tpu_custom_call.1} parent=1 // pred_check
      _
    $region7: #{tpu_custom_call.1} parent=1 // pred_check_branch
      %12 = sbr.rel (0) target = $region9
    $region8: #{tpu_custom_call.1} parent=1 // pred_region
      %14 = vsyncadd [#allocation3], 0
      %s15 = sshll.u32 %s1, 4
      %s16 = int_to_ptr.hbm [resolvable:$true] %s15
      %s17 = sshll.u32 [#allocation2], 4
      %s18 = int_to_ptr.vmem [resolvable:$true] %s17
      %23 = dma.hbm_to_vmem [thread:$0]  %s16, 8192, %s18, [#allocation3], 128, 128, 8
    $region9: #{tpu_custom_call.1} parent=1 // pred_fallthru
      _
    // Predicated region
    $region10: #{tpu_custom_call.1} parent=1 // pred_check
      _
    $region11: #{tpu_custom_call.1} parent=1 // pred_check_branch
      %25 = sbr.rel (0) target = $region13
    $region12: #{tpu_custom_call.1} parent=1 // pred_region
      %27 = dma.done [#allocation3], 8192
    $region13: #{tpu_custom_call.1} parent=1 // pred_fallthru
      _
    %v28 = vld [vmem:[%s0] sm:$0xff]
    %v29 = vld [vmem:[%s0 + $0x8] sm:$0xff]
    %v30 = vlaneseq
    %v31 = vand.u32 %v30, 127
    %32 = vset.pattern.permute.xlu0 0
    %33 = vperm.xlu0 %32, %v28
    %v34 = vpop.permute.xlu0 %33
    %35 = vset.pattern.permute.xlu0 0
    %36 = vperm.xlu0 %35, %v29
    %v37 = vpop.permute.xlu0 %36
    %vm38 = vcmp.eq.s32.totalorder %v31, %v34
    %vm39 = vcmp.eq.s32.totalorder %v31, %v37
    %v40 = vsel %vm38, 1, 0
    %v41 = vsel %vm39, 1, 0
    %v42 = vcvt.s32.f32 %v40
    %v43 = vcvt.s32.f32 %v41
    %44 = vset.pattern.permute.xlu0 1
    %45 = vperm.xlu0 %44, %v28
    %v46 = vpop.permute.xlu0 %45
    %47 = vset.pattern.permute.xlu0 1
    %48 = vperm.xlu0 %47, %v29
    %v49 = vpop.permute.xlu0 %48
    %vm50 = vcmp.eq.s32.totalorder %v31, %v46
    %vm51 = vcmp.eq.s32.totalorder %v31, %v49
    %v52 = vsel %vm50, 1, 0
    %v53 = vsel %vm51, 1, 0
    %v54 = vcvt.s32.f32 %v52
    %v55 = vcvt.s32.f32 %v53
    %56 = vset.pattern.permute.xlu0 2
    %57 = vperm.xlu0 %56, %v28
    %v58 = vpop.permute.xlu0 %57
    %59 = vset.pattern.permute.xlu0 2
    %60 = vperm.xlu0 %59, %v29
    %v61 = vpop.permute.xlu0 %60
    %vm62 = vcmp.eq.s32.totalorder %v31, %v58
    %vm63 = vcmp.eq.s32.totalorder %v31, %v61
    %v64 = vsel %vm62, 1, 0
    %v65 = vsel %vm63, 1, 0
    %v66 = vcvt.s32.f32 %v64
    %v67 = vcvt.s32.f32 %v65
    %68 = vset.pattern.permute.xlu0 3
    %69 = vperm.xlu0 %68, %v28
    %v70 = vpop.permute.xlu0 %69
    %71 = vset.pattern.permute.xlu0 3
    %72 = vperm.xlu0 %71, %v29
    %v73 = vpop.permute.xlu0 %72
    %vm74 = vcmp.eq.s32.totalorder %v31, %v70
    %vm75 = vcmp.eq.s32.totalorder %v31, %v73
    %v76 = vsel %vm74, 1, 0
    %v77 = vsel %vm75, 1, 0
    %v78 = vcvt.s32.f32 %v76
    %v79 = vcvt.s32.f32 %v77
    %v80 = vld [vmem:[#allocation2] sm:$0xff]
    %v81 = vld [vmem:[#allocation2 + $0x8] sm:$0xff]
    %v82 = vld [vmem:[#allocation2 + $0x10] sm:$0xff]
    %v83 = vld [vmem:[#allocation2 + $0x18] sm:$0xff]
    %v84 = vld [vmem:[#allocation2 + $0x20] sm:$0xff]
    %v85 = vld [vmem:[#allocation2 + $0x28] sm:$0xff]
    %v86 = vld [vmem:[#allocation2 + $0x30] sm:$0xff]
    %v87 = vld [vmem:[#allocation2 + $0x38] sm:$0xff]
    %v88 = vld [vmem:[#allocation2 + $0x40] sm:$0xff]
    %v89 = vld [vmem:[#allocation2 + $0x48] sm:$0xff]
    %v90 = vld [vmem:[#allocation2 + $0x50] sm:$0xff]
    %v91 = vld [vmem:[#allocation2 + $0x58] sm:$0xff]
    %v92 = vld [vmem:[#allocation2 + $0x60] sm:$0xff]
    %v93 = vld [vmem:[#allocation2 + $0x68] sm:$0xff]
    %v94 = vld [vmem:[#allocation2 + $0x70] sm:$0xff]
    %v95 = vld [vmem:[#allocation2 + $0x78] sm:$0xff]
    %v96 = vld [vmem:[#allocation2 + $0x80] sm:$0xff]
    %v97 = vld [vmem:[#allocation2 + $0x88] sm:$0xff]
    %v98 = vld [vmem:[#allocation2 + $0x90] sm:$0xff]
    %v99 = vld [vmem:[#allocation2 + $0x98] sm:$0xff]
    %v100 = vld [vmem:[#allocation2 + $0xa0] sm:$0xff]
    %v101 = vld [vmem:[#allocation2 + $0xa8] sm:$0xff]
    %v102 = vld [vmem:[#allocation2 + $0xb0] sm:$0xff]
    %v103 = vld [vmem:[#allocation2 + $0xb8] sm:$0xff]
    %v104 = vld [vmem:[#allocation2 + $0xc0] sm:$0xff]
    %v105 = vld [vmem:[#allocation2 + $0xc8] sm:$0xff]
    %v106 = vld [vmem:[#allocation2 + $0xd0] sm:$0xff]
    %v107 = vld [vmem:[#allocation2 + $0xd8] sm:$0xff]
    %v108 = vld [vmem:[#allocation2 + $0xe0] sm:$0xff]
    %v109 = vld [vmem:[#allocation2 + $0xe8] sm:$0xff]
    %v110 = vld [vmem:[#allocation2 + $0xf0] sm:$0xff]
    %v111 = vld [vmem:[#allocation2 + $0xf8] sm:$0xff]
    %v112 = vld [vmem:[#allocation2 + $0x100] sm:$0xff]
    %v113 = vld [vmem:[#allocation2 + $0x108] sm:$0xff]
    %v114 = vld [vmem:[#allocation2 + $0x110] sm:$0xff]
    %v115 = vld [vmem:[#allocation2 + $0x118] sm:$0xff]
    %v116 = vld [vmem:[#allocation2 + $0x120] sm:$0xff]
    %v117 = vld [vmem:[#allocation2 + $0x128] sm:$0xff]
    %v118 = vld [vmem:[#allocation2 + $0x130] sm:$0xff]
    %v119 = vld [vmem:[#allocation2 + $0x138] sm:$0xff]
    %v120 = vld [vmem:[#allocation2 + $0x140] sm:$0xff]
    %v121 = vld [vmem:[#allocation2 + $0x148] sm:$0xff]
    %v122 = vld [vmem:[#allocation2 + $0x150] sm:$0xff]
    %v123 = vld [vmem:[#allocation2 + $0x158] sm:$0xff]
    %v124 = vld [vmem:[#allocation2 + $0x160] sm:$0xff]
    %v125 = vld [vmem:[#allocation2 + $0x168] sm:$0xff]
    %v126 = vld [vmem:[#allocation2 + $0x170] sm:$0xff]
    %v127 = vld [vmem:[#allocation2 + $0x178] sm:$0xff]
    %v128 = vld [vmem:[#allocation2 + $0x180] sm:$0xff]
    %v129 = vld [vmem:[#allocation2 + $0x188] sm:$0xff]
    %v130 = vld [vmem:[#allocation2 + $0x190] sm:$0xff]
    %v131 = vld [vmem:[#allocation2 + $0x198] sm:$0xff]
    %v132 = vld [vmem:[#allocation2 + $0x1a0] sm:$0xff]
    %v133 = vld [vmem:[#allocation2 + $0x1a8] sm:$0xff]
    %v134 = vld [vmem:[#allocation2 + $0x1b0] sm:$0xff]
    %v135 = vld [vmem:[#allocation2 + $0x1b8] sm:$0xff]
    %v136 = vld [vmem:[#allocation2 + $0x1c0] sm:$0xff]
    %v137 = vld [vmem:[#allocation2 + $0x1c8] sm:$0xff]
    %v138 = vld [vmem:[#allocation2 + $0x1d0] sm:$0xff]
    %v139 = vld [vmem:[#allocation2 + $0x1d8] sm:$0xff]
    %v140 = vld [vmem:[#allocation2 + $0x1e0] sm:$0xff]
    %v141 = vld [vmem:[#allocation2 + $0x1e8] sm:$0xff]
    %v142 = vld [vmem:[#allocation2 + $0x1f0] sm:$0xff]
    %v143 = vld [vmem:[#allocation2 + $0x1f8] sm:$0xff]
    %v144 = vand.u32 %v95, 4294901760
    %145 = vmatpush.msra.mxu0 %v144
    %v146 = vand.u32 %v94, 4294901760
    %147 = vmatpush.msra.mxu0 %v146
    %v148 = vand.u32 %v93, 4294901760
    %149 = vmatpush.msra.mxu0 %v148
    %v150 = vand.u32 %v92, 4294901760
    %151 = vmatpush.msra.mxu0 %v150
    %v152 = vand.u32 %v91, 4294901760
    %153 = vmatpush.msra.mxu0 %v152
    %v154 = vand.u32 %v90, 4294901760
    %155 = vmatpush.msra.mxu0 %v154
    %v156 = vand.u32 %v89, 4294901760
    %157 = vmatpush.msra.mxu0 %v156
    %v158 = vand.u32 %v88, 4294901760
    %159 = vmatpush.msra.mxu0 %v158
    %v160 = vand.u32 %v87, 4294901760
    %161 = vmatpush.msra.mxu0 %v160
    %v162 = vand.u32 %v86, 4294901760
    %163 = vmatpush.msra.mxu0 %v162
    %v164 = vand.u32 %v85, 4294901760
    %165 = vmatpush.msra.mxu0 %v164
    %v166 = vand.u32 %v84, 4294901760
    %167 = vmatpush.msra.mxu0 %v166
    %v168 = vand.u32 %v83, 4294901760
    %169 = vmatpush.msra.mxu0 %v168
    %v170 = vand.u32 %v82, 4294901760
    %171 = vmatpush.msra.mxu0 %v170
    %v172 = vand.u32 %v81, 4294901760
    %173 = vmatpush.msra.mxu0 %v172
    %v174 = vand.u32 %v80, 4294901760
    %175 = vmatpush.msra.mxu0 %v174
    %v176 = vand.u32 %v42, 4294901760
    %v177 = vsub.f32 %v42, %v176
    %v178 = vand.u32 %v177, 4294901760
    %v179 = vsub.f32 %v177, %v178
    %v180 = vand.u32 %v179, 4294901760
    %181 = vmatmul.f32.gmra.mxu0 %v180
    %v182 = vpop.f32.mrf.mxu0
    %v183 = vadd.f32 0.0, %v182
    %v184 = vand.u32 %v43, 4294901760
    %v185 = vsub.f32 %v43, %v184
    %v186 = vand.u32 %v185, 4294901760
    %v187 = vsub.f32 %v185, %v186
    %v188 = vand.u32 %v187, 4294901760
    %189 = vmatmul.f32.gmra.mxu0 %v188
    %v190 = vpop.f32.mrf.mxu0
    %v191 = vadd.f32 0.0, %v190
    %192 = vdwg.mxu0
    %v193 = vand.u32 %v95, 4294901760
    %v194 = vsub.f32 %v95, %v193
    %v195 = vand.u32 %v194, 4294901760
    %v196 = vsub.f32 %v194, %v195
    %v197 = vand.u32 %v196, 4294901760
    %198 = vmatpush.msra.mxu0 %v197
    %v199 = vand.u32 %v94, 4294901760
    %v200 = vsub.f32 %v94, %v199
    %v201 = vand.u32 %v200, 4294901760
    %v202 = vsub.f32 %v200, %v201
    %v203 = vand.u32 %v202, 4294901760
    %204 = vmatpush.msra.mxu0 %v203
    %v205 = vand.u32 %v93, 4294901760
    %v206 = vsub.f32 %v93, %v205
    %v207 = vand.u32 %v206, 4294901760
    %v208 = vsub.f32 %v206, %v207
    %v209 = vand.u32 %v208, 4294901760
    %210 = vmatpush.msra.mxu0 %v209
    %v211 = vand.u32 %v92, 4294901760
    %v212 = vsub.f32 %v92, %v211
    %v213 = vand.u32 %v212, 4294901760
    %v214 = vsub.f32 %v212, %v213
    %v215 = vand.u32 %v214, 4294901760
    %216 = vmatpush.msra.mxu0 %v215
    %v217 = vand.u32 %v91, 4294901760
    %v218 = vsub.f32 %v91, %v217
    %v219 = vand.u32 %v218, 4294901760
    %v220 = vsub.f32 %v218, %v219
    %v221 = vand.u32 %v220, 4294901760
    %222 = vmatpush.msra.mxu0 %v221
    %v223 = vand.u32 %v90, 4294901760
    %v224 = vsub.f32 %v90, %v223
    %v225 = vand.u32 %v224, 4294901760
    %v226 = vsub.f32 %v224, %v225
    %v227 = vand.u32 %v226, 4294901760
    %228 = vmatpush.msra.mxu0 %v227
    %v229 = vand.u32 %v89, 4294901760
    %v230 = vsub.f32 %v89, %v229
    %v231 = vand.u32 %v230, 4294901760
    %v232 = vsub.f32 %v230, %v231
    %v233 = vand.u32 %v232, 4294901760
    %234 = vmatpush.msra.mxu0 %v233
    %v235 = vand.u32 %v88, 4294901760
    %v236 = vsub.f32 %v88, %v235
    %v237 = vand.u32 %v236, 4294901760
    %v238 = vsub.f32 %v236, %v237
    %v239 = vand.u32 %v238, 4294901760
    %240 = vmatpush.msra.mxu0 %v239
    %v241 = vand.u32 %v87, 4294901760
    %v242 = vsub.f32 %v87, %v241
    %v243 = vand.u32 %v242, 4294901760
    %v244 = vsub.f32 %v242, %v243
    %v245 = vand.u32 %v244, 4294901760
    %246 = vmatpush.msra.mxu0 %v245
    %v247 = vand.u32 %v86, 4294901760
    %v248 = vsub.f32 %v86, %v247
    %v249 = vand.u32 %v248, 4294901760
    %v250 = vsub.f32 %v248, %v249
    %v251 = vand.u32 %v250, 4294901760
    %252 = vmatpush.msra.mxu0 %v251
    %v253 = vand.u32 %v85, 4294901760
    %v254 = vsub.f32 %v85, %v253
    %v255 = vand.u32 %v254, 4294901760
    %v256 = vsub.f32 %v254, %v255
    %v257 = vand.u32 %v256, 4294901760
    %258 = vmatpush.msra.mxu0 %v257
    %v259 = vand.u32 %v84, 4294901760
    %v260 = vsub.f32 %v84, %v259
    %v261 = vand.u32 %v260, 4294901760
    %v262 = vsub.f32 %v260, %v261
    %v263 = vand.u32 %v262, 4294901760
    %264 = vmatpush.msra.mxu0 %v263
    %v265 = vand.u32 %v83, 4294901760
    %v266 = vsub.f32 %v83, %v265
    %v267 = vand.u32 %v266, 4294901760
    %v268 = vsub.f32 %v266, %v267
    %v269 = vand.u32 %v268, 4294901760
    %270 = vmatpush.msra.mxu0 %v269
    %v271 = vand.u32 %v82, 4294901760
    %v272 = vsub.f32 %v82, %v271
    %v273 = vand.u32 %v272, 4294901760
    %v274 = vsub.f32 %v272, %v273
    %v275 = vand.u32 %v274, 4294901760
    %276 = vmatpush.msra.mxu0 %v275
    %v277 = vand.u32 %v81, 4294901760
    %v278 = vsub.f32 %v81, %v277
    %v279 = vand.u32 %v278, 4294901760
    %v280 = vsub.f32 %v278, %v279
    %v281 = vand.u32 %v280, 4294901760
    %282 = vmatpush.msra.mxu0 %v281
    %v283 = vand.u32 %v80, 4294901760
    %v284 = vsub.f32 %v80, %v283
    %v285 = vand.u32 %v284, 4294901760
    %v286 = vsub.f32 %v284, %v285
    %v287 = vand.u32 %v286, 4294901760
    %288 = vmatpush.msra.mxu0 %v287
    %v289 = vand.u32 %v42, 4294901760
    %290 = vmatmul.f32.gmra.mxu0 %v289
    %v291 = vpop.f32.mrf.mxu0
    %v292 = vadd.f32 %v183, %v291
    %v293 = vand.u32 %v43, 4294901760
    %294 = vmatmul.f32.gmra.mxu0 %v293
    %v295 = vpop.f32.mrf.mxu0
    %v296 = vadd.f32 %v191, %v295
    %297 = vdwg.mxu0
    %v298 = vand.u32 %v95, 4294901760
    %v299 = vsub.f32 %v95, %v298
    %300 = vmatpush.msra.mxu0 %v299
    %v301 = vand.u32 %v94, 4294901760
    %v302 = vsub.f32 %v94, %v301
    %303 = vmatpush.msra.mxu0 %v302
    %v304 = vand.u32 %v93, 4294901760
    %v305 = vsub.f32 %v93, %v304
    %306 = vmatpush.msra.mxu0 %v305
    %v307 = vand.u32 %v92, 4294901760
    %v308 = vsub.f32 %v92, %v307
    %309 = vmatpush.msra.mxu0 %v308
    %v310 = vand.u32 %v91, 4294901760
    %v311 = vsub.f32 %v91, %v310
    %312 = vmatpush.msra.mxu0 %v311
    %v313 = vand.u32 %v90, 4294901760
    %v314 = vsub.f32 %v90, %v313
    %315 = vmatpush.msra.mxu0 %v314
    %v316 = vand.u32 %v89, 4294901760
    %v317 = vsub.f32 %v89, %v316
    %318 = vmatpush.msra.mxu0 %v317
    %v319 = vand.u32 %v88, 4294901760
    %v320 = vsub.f32 %v88, %v319
    %321 = vmatpush.msra.mxu0 %v320
    %v322 = vand.u32 %v87, 4294901760
    %v323 = vsub.f32 %v87, %v322
    %324 = vmatpush.msra.mxu0 %v323
    %v325 = vand.u32 %v86, 4294901760
    %v326 = vsub.f32 %v86, %v325
    %327 = vmatpush.msra.mxu0 %v326
    %v328 = vand.u32 %v85, 4294901760
    %v329 = vsub.f32 %v85, %v328
    %330 = vmatpush.msra.mxu0 %v329
    %v331 = vand.u32 %v84, 4294901760
    %v332 = vsub.f32 %v84, %v331
    %333 = vmatpush.msra.mxu0 %v332
    %v334 = vand.u32 %v83, 4294901760
    %v335 = vsub.f32 %v83, %v334
    %336 = vmatpush.msra.mxu0 %v335
    %v337 = vand.u32 %v82, 4294901760
    %v338 = vsub.f32 %v82, %v337
    %339 = vmatpush.msra.mxu0 %v338
    %v340 = vand.u32 %v81, 4294901760
    %v341 = vsub.f32 %v81, %v340
    %342 = vmatpush.msra.mxu0 %v341
    %v343 = vand.u32 %v80, 4294901760
    %v344 = vsub.f32 %v80, %v343
    %345 = vmatpush.msra.mxu0 %v344
    %v346 = vand.u32 %v42, 4294901760
    %v347 = vsub.f32 %v42, %v346
    %348 = vmatmul.f32.gmra.mxu0 %v347
    %v349 = vpop.f32.mrf.mxu0
    %v350 = vadd.f32 %v292, %v349
    %v351 = vand.u32 %v43, 4294901760
    %v352 = vsub.f32 %v43, %v351
    %353 = vmatmul.f32.gmra.mxu0 %v352
    %v354 = vpop.f32.mrf.mxu0
    %v355 = vadd.f32 %v296, %v354
    %356 = vdwg.mxu0
    %v357 = vand.u32 %v95, 4294901760
    %358 = vmatpush.msra.mxu0 %v357
    %v359 = vand.u32 %v94, 4294901760
    %360 = vmatpush.msra.mxu0 %v359
    %v361 = vand.u32 %v93, 4294901760
    %362 = vmatpush.msra.mxu0 %v361
    %v363 = vand.u32 %v92, 4294901760
    %364 = vmatpush.msra.mxu0 %v363
    %v365 = vand.u32 %v91, 4294901760
    %366 = vmatpush.msra.mxu0 %v365
    %v367 = vand.u32 %v90, 4294901760
    %368 = vmatpush.msra.mxu0 %v367
    %v369 = vand.u32 %v89, 4294901760
    %370 = vmatpush.msra.mxu0 %v369
    %v371 = vand.u32 %v88, 4294901760
    %372 = vmatpush.msra.mxu0 %v371
    %v373 = vand.u32 %v87, 4294901760
    %374 = vmatpush.msra.mxu0 %v373
    %v375 = vand.u32 %v86, 4294901760
    %376 = vmatpush.msra.mxu0 %v375
    %v377 = vand.u32 %v85, 4294901760
    %378 = vmatpush.msra.mxu0 %v377
    %v379 = vand.u32 %v84, 4294901760
    %380 = vmatpush.msra.mxu0 %v379
    %v381 = vand.u32 %v83, 4294901760
    %382 = vmatpush.msra.mxu0 %v381
    %v383 = vand.u32 %v82, 4294901760
    %384 = vmatpush.msra.mxu0 %v383
    %v385 = vand.u32 %v81, 4294901760
    %386 = vmatpush.msra.mxu0 %v385
    %v387 = vand.u32 %v80, 4294901760
    %388 = vmatpush.msra.mxu0 %v387
    %v389 = vand.u32 %v42, 4294901760
    %v390 = vsub.f32 %v42, %v389
    %v391 = vand.u32 %v390, 4294901760
    %392 = vmatmul.f32.gmra.mxu0 %v391
    %v393 = vpop.f32.mrf.mxu0
    %v394 = vadd.f32 %v350, %v393
    %v395 = vand.u32 %v43, 4294901760
    %v396 = vsub.f32 %v43, %v395
    %v397 = vand.u32 %v396, 4294901760
    %398 = vmatmul.f32.gmra.mxu0 %v397
    %v399 = vpop.f32.mrf.mxu0
    %v400 = vadd.f32 %v355, %v399
    %401 = vdwg.mxu0
    %v402 = vand.u32 %v95, 4294901760
    %v403 = vsub.f32 %v95, %v402
    %v404 = vand.u32 %v403, 4294901760
    %405 = vmatpush.msra.mxu0 %v404
    %v406 = vand.u32 %v94, 4294901760
    %v407 = vsub.f32 %v94, %v406
    %v408 = vand.u32 %v407, 4294901760
    %409 = vmatpush.msra.mxu0 %v408
    %v410 = vand.u32 %v93, 4294901760
    %v411 = vsub.f32 %v93, %v410
    %v412 = vand.u32 %v411, 4294901760
    %413 = vmatpush.msra.mxu0 %v412
    %v414 = vand.u32 %v92, 4294901760
    %v415 = vsub.f32 %v92, %v414
    %v416 = vand.u32 %v415, 4294901760
    %417 = vmatpush.msra.mxu0 %v416
    %v418 = vand.u32 %v91, 4294901760
    %v419 = vsub.f32 %v91, %v418
    %v420 = vand.u32 %v419, 4294901760
    %421 = vmatpush.msra.mxu0 %v420
    %v422 = vand.u32 %v90, 4294901760
    %v423 = vsub.f32 %v90, %v422
    %v424 = vand.u32 %v423, 4294901760
    %425 = vmatpush.msra.mxu0 %v424
    %v426 = vand.u32 %v89, 4294901760
    %v427 = vsub.f32 %v89, %v426
    %v428 = vand.u32 %v427, 4294901760
    %429 = vmatpush.msra.mxu0 %v428
    %v430 = vand.u32 %v88, 4294901760
    %v431 = vsub.f32 %v88, %v430
    %v432 = vand.u32 %v431, 4294901760
    %433 = vmatpush.msra.mxu0 %v432
    %v434 = vand.u32 %v87, 4294901760
    %v435 = vsub.f32 %v87, %v434
    %v436 = vand.u32 %v435, 4294901760
    %437 = vmatpush.msra.mxu0 %v436
    %v438 = vand.u32 %v86, 4294901760
    %v439 = vsub.f32 %v86, %v438
    %v440 = vand.u32 %v439, 4294901760
    %441 = vmatpush.msra.mxu0 %v440
    %v442 = vand.u32 %v85, 4294901760
    %v443 = vsub.f32 %v85, %v442
    %v444 = vand.u32 %v443, 4294901760
    %445 = vmatpush.msra.mxu0 %v444
    %v446 = vand.u32 %v84, 4294901760
    %v447 = vsub.f32 %v84, %v446
    %v448 = vand.u32 %v447, 4294901760
    %449 = vmatpush.msra.mxu0 %v448
    %v450 = vand.u32 %v83, 4294901760
    %v451 = vsub.f32 %v83, %v450
    %v452 = vand.u32 %v451, 4294901760
    %453 = vmatpush.msra.mxu0 %v452
    %v454 = vand.u32 %v82, 4294901760
    %v455 = vsub.f32 %v82, %v454
    %v456 = vand.u32 %v455, 4294901760
    %457 = vmatpush.msra.mxu0 %v456
    %v458 = vand.u32 %v81, 4294901760
    %v459 = vsub.f32 %v81, %v458
    %v460 = vand.u32 %v459, 4294901760
    %461 = vmatpush.msra.mxu0 %v460
    %v462 = vand.u32 %v80, 4294901760
    %v463 = vsub.f32 %v80, %v462
    %v464 = vand.u32 %v463, 4294901760
    %465 = vmatpush.msra.mxu0 %v464
    %v466 = vand.u32 %v42, 4294901760
    %467 = vmatmul.f32.gmra.mxu0 %v466
    %v468 = vpop.f32.mrf.mxu0
    %v469 = vadd.f32 %v394, %v468
    %v470 = vand.u32 %v43, 4294901760
    %471 = vmatmul.f32.gmra.mxu0 %v470
    %v472 = vpop.f32.mrf.mxu0
    %v473 = vadd.f32 %v400, %v472
    %474 = vdwg.mxu0
    %v475 = vand.u32 %v95, 4294901760
    %476 = vmatpush.msra.mxu0 %v475
    %v477 = vand.u32 %v94, 4294901760
    %478 = vmatpush.msra.mxu0 %v477
    %v479 = vand.u32 %v93, 4294901760
    %480 = vmatpush.msra.mxu0 %v479
    %v481 = vand.u32 %v92, 4294901760
    %482 = vmatpush.msra.mxu0 %v481
    %v483 = vand.u32 %v91, 4294901760
    %484 = vmatpush.msra.mxu0 %v483
    %v485 = vand.u32 %v90, 4294901760
    %486 = vmatpush.msra.mxu0 %v485
    %v487 = vand.u32 %v89, 4294901760
    %488 = vmatpush.msra.mxu0 %v487
    %v489 = vand.u32 %v88, 4294901760
    %490 = vmatpush.msra.mxu0 %v489
    %v491 = vand.u32 %v87, 4294901760
    %492 = vmatpush.msra.mxu0 %v491
    %v493 = vand.u32 %v86, 4294901760
    %494 = vmatpush.msra.mxu0 %v493
    %v495 = vand.u32 %v85, 4294901760
    %496 = vmatpush.msra.mxu0 %v495
    %v497 = vand.u32 %v84, 4294901760
    %498 = vmatpush.msra.mxu0 %v497
    %v499 = vand.u32 %v83, 4294901760
    %500 = vmatpush.msra.mxu0 %v499
    %v501 = vand.u32 %v82, 4294901760
    %502 = vmatpush.msra.mxu0 %v501
    %v503 = vand.u32 %v81, 4294901760
    %504 = vmatpush.msra.mxu0 %v503
    %v505 = vand.u32 %v80, 4294901760
    %506 = vmatpush.msra.mxu0 %v505
    %v507 = vand.u32 %v42, 4294901760
    %508 = vmatmul.f32.gmra.mxu0 %v507
    %v509 = vpop.f32.mrf.mxu0
    %v510 = vadd.f32 %v469, %v509
    %v511 = vand.u32 %v43, 4294901760
    %512 = vmatmul.f32.gmra.mxu0 %v511
    %v513 = vpop.f32.mrf.mxu0
    %v514 = vadd.f32 %v473, %v513
    %515 = vdwg.mxu0
    %v516 = vand.u32 %v111, 4294901760
    %517 = vmatpush.msra.mxu0 %v516
    %v518 = vand.u32 %v110, 4294901760
    %519 = vmatpush.msra.mxu0 %v518
    %v520 = vand.u32 %v109, 4294901760
    %521 = vmatpush.msra.mxu0 %v520
    %v522 = vand.u32 %v108, 4294901760
    %523 = vmatpush.msra.mxu0 %v522
    %v524 = vand.u32 %v107, 4294901760
    %525 = vmatpush.msra.mxu0 %v524
    %v526 = vand.u32 %v106, 4294901760
    %527 = vmatpush.msra.mxu0 %v526
    %v528 = vand.u32 %v105, 4294901760
    %529 = vmatpush.msra.mxu0 %v528
    %v530 = vand.u32 %v104, 4294901760
    %531 = vmatpush.msra.mxu0 %v530
    %v532 = vand.u32 %v103, 4294901760
    %533 = vmatpush.msra.mxu0 %v532
    %v534 = vand.u32 %v102, 4294901760
    %535 = vmatpush.msra.mxu0 %v534
    %v536 = vand.u32 %v101, 4294901760
    %537 = vmatpush.msra.mxu0 %v536
    %v538 = vand.u32 %v100, 4294901760
    %539 = vmatpush.msra.mxu0 %v538
    %v540 = vand.u32 %v99, 4294901760
    %541 = vmatpush.msra.mxu0 %v540
    %v542 = vand.u32 %v98, 4294901760
    %543 = vmatpush.msra.mxu0 %v542
    %v544 = vand.u32 %v97, 4294901760
    %545 = vmatpush.msra.mxu0 %v544
    %v546 = vand.u32 %v96, 4294901760
    %547 = vmatpush.msra.mxu0 %v546
    %v548 = vand.u32 %v54, 4294901760
    %v549 = vsub.f32 %v54, %v548
    %v550 = vand.u32 %v549, 4294901760
    %v551 = vsub.f32 %v549, %v550
    %v552 = vand.u32 %v551, 4294901760
    %553 = vmatmul.f32.gmra.mxu0 %v552
    %v554 = vpop.f32.mrf.mxu0
    %v555 = vadd.f32 %v510, %v554
    %v556 = vand.u32 %v55, 4294901760
    %v557 = vsub.f32 %v55, %v556
    %v558 = vand.u32 %v557, 4294901760
    %v559 = vsub.f32 %v557, %v558
    %v560 = vand.u32 %v559, 4294901760
    %561 = vmatmul.f32.gmra.mxu0 %v560
    %v562 = vpop.f32.mrf.mxu0
    %v563 = vadd.f32 %v514, %v562
    %564 = vdwg.mxu0
    %v565 = vand.u32 %v111, 4294901760
    %v566 = vsub.f32 %v111, %v565
    %v567 = vand.u32 %v566, 4294901760
    %v568 = vsub.f32 %v566, %v567
    %v569 = vand.u32 %v568, 4294901760
    %570 = vmatpush.msra.mxu0 %v569
    %v571 = vand.u32 %v110, 4294901760
    %v572 = vsub.f32 %v110, %v571
    %v573 = vand.u32 %v572, 4294901760
    %v574 = vsub.f32 %v572, %v573
    %v575 = vand.u32 %v574, 4294901760
    %576 = vmatpush.msra.mxu0 %v575
    %v577 = vand.u32 %v109, 4294901760
    %v578 = vsub.f32 %v109, %v577
    %v579 = vand.u32 %v578, 4294901760
    %v580 = vsub.f32 %v578, %v579
    %v581 = vand.u32 %v580, 4294901760
    %582 = vmatpush.msra.mxu0 %v581
    %v583 = vand.u32 %v108, 4294901760
    %v584 = vsub.f32 %v108, %v583
    %v585 = vand.u32 %v584, 4294901760
    %v586 = vsub.f32 %v584, %v585
    %v587 = vand.u32 %v586, 4294901760
    %588 = vmatpush.msra.mxu0 %v587
    %v589 = vand.u32 %v107, 4294901760
    %v590 = vsub.f32 %v107, %v589
    %v591 = vand.u32 %v590, 4294901760
    %v592 = vsub.f32 %v590, %v591
    %v593 = vand.u32 %v592, 4294901760
    %594 = vmatpush.msra.mxu0 %v593
    %v595 = vand.u32 %v106, 4294901760
    %v596 = vsub.f32 %v106, %v595
    %v597 = vand.u32 %v596, 4294901760
    %v598 = vsub.f32 %v596, %v597
    %v599 = vand.u32 %v598, 4294901760
    %600 = vmatpush.msra.mxu0 %v599
    %v601 = vand.u32 %v105, 4294901760
    %v602 = vsub.f32 %v105, %v601
    %v603 = vand.u32 %v602, 4294901760
    %v604 = vsub.f32 %v602, %v603
    %v605 = vand.u32 %v604, 4294901760
    %606 = vmatpush.msra.mxu0 %v605
    %v607 = vand.u32 %v104, 4294901760
    %v608 = vsub.f32 %v104, %v607
    %v609 = vand.u32 %v608, 4294901760
    %v610 = vsub.f32 %v608, %v609
    %v611 = vand.u32 %v610, 4294901760
    %612 = vmatpush.msra.mxu0 %v611
    %v613 = vand.u32 %v103, 4294901760
    %v614 = vsub.f32 %v103, %v613
    %v615 = vand.u32 %v614, 4294901760
    %v616 = vsub.f32 %v614, %v615
    %v617 = vand.u32 %v616, 4294901760
    %618 = vmatpush.msra.mxu0 %v617
    %v619 = vand.u32 %v102, 4294901760
    %v620 = vsub.f32 %v102, %v619
    %v621 = vand.u32 %v620, 4294901760
    %v622 = vsub.f32 %v620, %v621
    %v623 = vand.u32 %v622, 4294901760
    %624 = vmatpush.msra.mxu0 %v623
    %v625 = vand.u32 %v101, 4294901760
    %v626 = vsub.f32 %v101, %v625
    %v627 = vand.u32 %v626, 4294901760
    %v628 = vsub.f32 %v626, %v627
    %v629 = vand.u32 %v628, 4294901760
    %630 = vmatpush.msra.mxu0 %v629
    %v631 = vand.u32 %v100, 4294901760
    %v632 = vsub.f32 %v100, %v631
    %v633 = vand.u32 %v632, 4294901760
    %v634 = vsub.f32 %v632, %v633
    %v635 = vand.u32 %v634, 4294901760
    %636 = vmatpush.msra.mxu0 %v635
    %v637 = vand.u32 %v99, 4294901760
    %v638 = vsub.f32 %v99, %v637
    %v639 = vand.u32 %v638, 4294901760
    %v640 = vsub.f32 %v638, %v639
    %v641 = vand.u32 %v640, 4294901760
    %642 = vmatpush.msra.mxu0 %v641
    %v643 = vand.u32 %v98, 4294901760
    %v644 = vsub.f32 %v98, %v643
    %v645 = vand.u32 %v644, 4294901760
    %v646 = vsub.f32 %v644, %v645
    %v647 = vand.u32 %v646, 4294901760
    %648 = vmatpush.msra.mxu0 %v647
    %v649 = vand.u32 %v97, 4294901760
    %v650 = vsub.f32 %v97, %v649
    %v651 = vand.u32 %v650, 4294901760
    %v652 = vsub.f32 %v650, %v651
    %v653 = vand.u32 %v652, 4294901760
    %654 = vmatpush.msra.mxu0 %v653
    %v655 = vand.u32 %v96, 4294901760
    %v656 = vsub.f32 %v96, %v655
    %v657 = vand.u32 %v656, 4294901760
    %v658 = vsub.f32 %v656, %v657
    %v659 = vand.u32 %v658, 4294901760
    %660 = vmatpush.msra.mxu0 %v659
    %v661 = vand.u32 %v54, 4294901760
    %662 = vmatmul.f32.gmra.mxu0 %v661
    %v663 = vpop.f32.mrf.mxu0
    %v664 = vadd.f32 %v555, %v663
    %v665 = vand.u32 %v55, 4294901760
    %666 = vmatmul.f32.gmra.mxu0 %v665
    %v667 = vpop.f32.mrf.mxu0
    %v668 = vadd.f32 %v563, %v667
    %669 = vdwg.mxu0
    %v670 = vand.u32 %v111, 4294901760
    %v671 = vsub.f32 %v111, %v670
    %672 = vmatpush.msra.mxu0 %v671
    %v673 = vand.u32 %v110, 4294901760
    %v674 = vsub.f32 %v110, %v673
    %675 = vmatpush.msra.mxu0 %v674
    %v676 = vand.u32 %v109, 4294901760
    %v677 = vsub.f32 %v109, %v676
    %678 = vmatpush.msra.mxu0 %v677
    %v679 = vand.u32 %v108, 4294901760
    %v680 = vsub.f32 %v108, %v679
    %681 = vmatpush.msra.mxu0 %v680
    %v682 = vand.u32 %v107, 4294901760
    %v683 = vsub.f32 %v107, %v682
    %684 = vmatpush.msra.mxu0 %v683
    %v685 = vand.u32 %v106, 4294901760
    %v686 = vsub.f32 %v106, %v685
    %687 = vmatpush.msra.mxu0 %v686
    %v688 = vand.u32 %v105, 4294901760
    %v689 = vsub.f32 %v105, %v688
    %690 = vmatpush.msra.mxu0 %v689
    %v691 = vand.u32 %v104, 4294901760
    %v692 = vsub.f32 %v104, %v691
    %693 = vmatpush.msra.mxu0 %v692
    %v694 = vand.u32 %v103, 4294901760
    %v695 = vsub.f32 %v103, %v694
    %696 = vmatpush.msra.mxu0 %v695
    %v697 = vand.u32 %v102, 4294901760
    %v698 = vsub.f32 %v102, %v697
    %699 = vmatpush.msra.mxu0 %v698
    %v700 = vand.u32 %v101, 4294901760
    %v701 = vsub.f32 %v101, %v700
    %702 = vmatpush.msra.mxu0 %v701
    %v703 = vand.u32 %v100, 4294901760
    %v704 = vsub.f32 %v100, %v703
    %705 = vmatpush.msra.mxu0 %v704
    %v706 = vand.u32 %v99, 4294901760
    %v707 = vsub.f32 %v99, %v706
    %708 = vmatpush.msra.mxu0 %v707
    %v709 = vand.u32 %v98, 4294901760
    %v710 = vsub.f32 %v98, %v709
    %711 = vmatpush.msra.mxu0 %v710
    %v712 = vand.u32 %v97, 4294901760
    %v713 = vsub.f32 %v97, %v712
    %714 = vmatpush.msra.mxu0 %v713
    %v715 = vand.u32 %v96, 4294901760
    %v716 = vsub.f32 %v96, %v715
    %717 = vmatpush.msra.mxu0 %v716
    %v718 = vand.u32 %v54, 4294901760
    %v719 = vsub.f32 %v54, %v718
    %720 = vmatmul.f32.gmra.mxu0 %v719
    %v721 = vpop.f32.mrf.mxu0
    %v722 = vadd.f32 %v664, %v721
    %v723 = vand.u32 %v55, 4294901760
    %v724 = vsub.f32 %v55, %v723
    %725 = vmatmul.f32.gmra.mxu0 %v724
    %v726 = vpop.f32.mrf.mxu0
    %v727 = vadd.f32 %v668, %v726
    %728 = vdwg.mxu0
    %v729 = vand.u32 %v111, 4294901760
    %730 = vmatpush.msra.mxu0 %v729
    %v731 = vand.u32 %v110, 4294901760
    %732 = vmatpush.msra.mxu0 %v731
    %v733 = vand.u32 %v109, 4294901760
    %734 = vmatpush.msra.mxu0 %v733
    %v735 = vand.u32 %v108, 4294901760
    %736 = vmatpush.msra.mxu0 %v735
    %v737 = vand.u32 %v107, 4294901760
    %738 = vmatpush.msra.mxu0 %v737
    %v739 = vand.u32 %v106, 4294901760
    %740 = vmatpush.msra.mxu0 %v739
    %v741 = vand.u32 %v105, 4294901760
    %742 = vmatpush.msra.mxu0 %v741
    %v743 = vand.u32 %v104, 4294901760
    %744 = vmatpush.msra.mxu0 %v743
    %v745 = vand.u32 %v103, 4294901760
    %746 = vmatpush.msra.mxu0 %v745
    %v747 = vand.u32 %v102, 4294901760
    %748 = vmatpush.msra.mxu0 %v747
    %v749 = vand.u32 %v101, 4294901760
    %750 = vmatpush.msra.mxu0 %v749
    %v751 = vand.u32 %v100, 4294901760
    %752 = vmatpush.msra.mxu0 %v751
    %v753 = vand.u32 %v99, 4294901760
    %754 = vmatpush.msra.mxu0 %v753
    %v755 = vand.u32 %v98, 4294901760
    %756 = vmatpush.msra.mxu0 %v755
    %v757 = vand.u32 %v97, 4294901760
    %758 = vmatpush.msra.mxu0 %v757
    %v759 = vand.u32 %v96, 4294901760
    %760 = vmatpush.msra.mxu0 %v759
    %v761 = vand.u32 %v54, 4294901760
    %v762 = vsub.f32 %v54, %v761
    %v763 = vand.u32 %v762, 4294901760
    %764 = vmatmul.f32.gmra.mxu0 %v763
    %v765 = vpop.f32.mrf.mxu0
    %v766 = vadd.f32 %v722, %v765
    %v767 = vand.u32 %v55, 4294901760
    %v768 = vsub.f32 %v55, %v767
    %v769 = vand.u32 %v768, 4294901760
    %770 = vmatmul.f32.gmra.mxu0 %v769
    %v771 = vpop.f32.mrf.mxu0
    %v772 = vadd.f32 %v727, %v771
    %773 = vdwg.mxu0
    %v774 = vand.u32 %v111, 4294901760
    %v775 = vsub.f32 %v111, %v774
    %v776 = vand.u32 %v775, 4294901760
    %777 = vmatpush.msra.mxu0 %v776
    %v778 = vand.u32 %v110, 4294901760
    %v779 = vsub.f32 %v110, %v778
    %v780 = vand.u32 %v779, 4294901760
    %781 = vmatpush.msra.mxu0 %v780
    %v782 = vand.u32 %v109, 4294901760
    %v783 = vsub.f32 %v109, %v782
    %v784 = vand.u32 %v783, 4294901760
    %785 = vmatpush.msra.mxu0 %v784
    %v786 = vand.u32 %v108, 4294901760
    %v787 = vsub.f32 %v108, %v786
    %v788 = vand.u32 %v787, 4294901760
    %789 = vmatpush.msra.mxu0 %v788
    %v790 = vand.u32 %v107, 4294901760
    %v791 = vsub.f32 %v107, %v790
    %v792 = vand.u32 %v791, 4294901760
    %793 = vmatpush.msra.mxu0 %v792
    %v794 = vand.u32 %v106, 4294901760
    %v795 = vsub.f32 %v106, %v794
    %v796 = vand.u32 %v795, 4294901760
    %797 = vmatpush.msra.mxu0 %v796
    %v798 = vand.u32 %v105, 4294901760
    %v799 = vsub.f32 %v105, %v798
    %v800 = vand.u32 %v799, 4294901760
    %801 = vmatpush.msra.mxu0 %v800
    %v802 = vand.u32 %v104, 4294901760
    %v803 = vsub.f32 %v104, %v802
    %v804 = vand.u32 %v803, 4294901760
    %805 = vmatpush.msra.mxu0 %v804
    %v806 = vand.u32 %v103, 4294901760
    %v807 = vsub.f32 %v103, %v806
    %v808 = vand.u32 %v807, 4294901760
    %809 = vmatpush.msra.mxu0 %v808
    %v810 = vand.u32 %v102, 4294901760
    %v811 = vsub.f32 %v102, %v810
    %v812 = vand.u32 %v811, 4294901760
    %813 = vmatpush.msra.mxu0 %v812
    %v814 = vand.u32 %v101, 4294901760
    %v815 = vsub.f32 %v101, %v814
    %v816 = vand.u32 %v815, 4294901760
    %817 = vmatpush.msra.mxu0 %v816
    %v818 = vand.u32 %v100, 4294901760
    %v819 = vsub.f32 %v100, %v818
    %v820 = vand.u32 %v819, 4294901760
    %821 = vmatpush.msra.mxu0 %v820
    %v822 = vand.u32 %v99, 4294901760
    %v823 = vsub.f32 %v99, %v822
    %v824 = vand.u32 %v823, 4294901760
    %825 = vmatpush.msra.mxu0 %v824
    %v826 = vand.u32 %v98, 4294901760
    %v827 = vsub.f32 %v98, %v826
    %v828 = vand.u32 %v827, 4294901760
    %829 = vmatpush.msra.mxu0 %v828
    %v830 = vand.u32 %v97, 4294901760
    %v831 = vsub.f32 %v97, %v830
    %v832 = vand.u32 %v831, 4294901760
    %833 = vmatpush.msra.mxu0 %v832
    %v834 = vand.u32 %v96, 4294901760
    %v835 = vsub.f32 %v96, %v834
    %v836 = vand.u32 %v835, 4294901760
    %837 = vmatpush.msra.mxu0 %v836
    %v838 = vand.u32 %v54, 4294901760
    %839 = vmatmul.f32.gmra.mxu0 %v838
    %v840 = vpop.f32.mrf.mxu0
    %v841 = vadd.f32 %v766, %v840
    %v842 = vand.u32 %v55, 4294901760
    %843 = vmatmul.f32.gmra.mxu0 %v842
    %v844 = vpop.f32.mrf.mxu0
    %v845 = vadd.f32 %v772, %v844
    %846 = vdwg.mxu0
    %v847 = vand.u32 %v111, 4294901760
    %848 = vmatpush.msra.mxu0 %v847
    %v849 = vand.u32 %v110, 4294901760
    %850 = vmatpush.msra.mxu0 %v849
    %v851 = vand.u32 %v109, 4294901760
    %852 = vmatpush.msra.mxu0 %v851
    %v853 = vand.u32 %v108, 4294901760
    %854 = vmatpush.msra.mxu0 %v853
    %v855 = vand.u32 %v107, 4294901760
    %856 = vmatpush.msra.mxu0 %v855
    %v857 = vand.u32 %v106, 4294901760
    %858 = vmatpush.msra.mxu0 %v857
    %v859 = vand.u32 %v105, 4294901760
    %860 = vmatpush.msra.mxu0 %v859
    %v861 = vand.u32 %v104, 4294901760
    %862 = vmatpush.msra.mxu0 %v861
    %v863 = vand.u32 %v103, 4294901760
    %864 = vmatpush.msra.mxu0 %v863
    %v865 = vand.u32 %v102, 4294901760
    %866 = vmatpush.msra.mxu0 %v865
    %v867 = vand.u32 %v101, 4294901760
    %868 = vmatpush.msra.mxu0 %v867
    %v869 = vand.u32 %v100, 4294901760
    %870 = vmatpush.msra.mxu0 %v869
    %v871 = vand.u32 %v99, 4294901760
    %872 = vmatpush.msra.mxu0 %v871
    %v873 = vand.u32 %v98, 4294901760
    %874 = vmatpush.msra.mxu0 %v873
    %v875 = vand.u32 %v97, 4294901760
    %876 = vmatpush.msra.mxu0 %v875
    %v877 = vand.u32 %v96, 4294901760
    %878 = vmatpush.msra.mxu0 %v877
    %v879 = vand.u32 %v54, 4294901760
    %880 = vmatmul.f32.gmra.mxu0 %v879
    %v881 = vpop.f32.mrf.mxu0
    %v882 = vadd.f32 %v841, %v881
    %v883 = vand.u32 %v55, 4294901760
    %884 = vmatmul.f32.gmra.mxu0 %v883
    %v885 = vpop.f32.mrf.mxu0
    %v886 = vadd.f32 %v845, %v885
    %887 = vdwg.mxu0
    %v888 = vand.u32 %v127, 4294901760
    %889 = vmatpush.msra.mxu0 %v888
    %v890 = vand.u32 %v126, 4294901760
    %891 = vmatpush.msra.mxu0 %v890
    %v892 = vand.u32 %v125, 4294901760
    %893 = vmatpush.msra.mxu0 %v892
    %v894 = vand.u32 %v124, 4294901760
    %895 = vmatpush.msra.mxu0 %v894
    %v896 = vand.u32 %v123, 4294901760
    %897 = vmatpush.msra.mxu0 %v896
    %v898 = vand.u32 %v122, 4294901760
    %899 = vmatpush.msra.mxu0 %v898
    %v900 = vand.u32 %v121, 4294901760
    %901 = vmatpush.msra.mxu0 %v900
    %v902 = vand.u32 %v120, 4294901760
    %903 = vmatpush.msra.mxu0 %v902
    %v904 = vand.u32 %v119, 4294901760
    %905 = vmatpush.msra.mxu0 %v904
    %v906 = vand.u32 %v118, 4294901760
    %907 = vmatpush.msra.mxu0 %v906
    %v908 = vand.u32 %v117, 4294901760
    %909 = vmatpush.msra.mxu0 %v908
    %v910 = vand.u32 %v116, 4294901760
    %911 = vmatpush.msra.mxu0 %v910
    %v912 = vand.u32 %v115, 4294901760
    %913 = vmatpush.msra.mxu0 %v912
    %v914 = vand.u32 %v114, 4294901760
    %915 = vmatpush.msra.mxu0 %v914
    %v916 = vand.u32 %v113, 4294901760
    %917 = vmatpush.msra.mxu0 %v916
    %v918 = vand.u32 %v112, 4294901760
    %919 = vmatpush.msra.mxu0 %v918
    %v920 = vand.u32 %v66, 4294901760
    %v921 = vsub.f32 %v66, %v920
    %v922 = vand.u32 %v921, 4294901760
    %v923 = vsub.f32 %v921, %v922
    %v924 = vand.u32 %v923, 4294901760
    %925 = vmatmul.f32.gmra.mxu0 %v924
    %v926 = vpop.f32.mrf.mxu0
    %v927 = vadd.f32 %v882, %v926
    %v928 = vand.u32 %v67, 4294901760
    %v929 = vsub.f32 %v67, %v928
    %v930 = vand.u32 %v929, 4294901760
    %v931 = vsub.f32 %v929, %v930
    %v932 = vand.u32 %v931, 4294901760
    %933 = vmatmul.f32.gmra.mxu0 %v932
    %v934 = vpop.f32.mrf.mxu0
    %v935 = vadd.f32 %v886, %v934
    %936 = vdwg.mxu0
    %v937 = vand.u32 %v127, 4294901760
    %v938 = vsub.f32 %v127, %v937
    %v939 = vand.u32 %v938, 4294901760
    %v940 = vsub.f32 %v938, %v939
    %v941 = vand.u32 %v940, 4294901760
    %942 = vmatpush.msra.mxu0 %v941
    %v943 = vand.u32 %v126, 4294901760
    %v944 = vsub.f32 %v126, %v943
    %v945 = vand.u32 %v944, 4294901760
    %v946 = vsub.f32 %v944, %v945
    %v947 = vand.u32 %v946, 4294901760
    %948 = vmatpush.msra.mxu0 %v947
    %v949 = vand.u32 %v125, 4294901760
    %v950 = vsub.f32 %v125, %v949
    %v951 = vand.u32 %v950, 4294901760
    %v952 = vsub.f32 %v950, %v951
    %v953 = vand.u32 %v952, 4294901760
    %954 = vmatpush.msra.mxu0 %v953
    %v955 = vand.u32 %v124, 4294901760
    %v956 = vsub.f32 %v124, %v955
    %v957 = vand.u32 %v956, 4294901760
    %v958 = vsub.f32 %v956, %v957
    %v959 = vand.u32 %v958, 4294901760
    %960 = vmatpush.msra.mxu0 %v959
    %v961 = vand.u32 %v123, 4294901760
    %v962 = vsub.f32 %v123, %v961
    %v963 = vand.u32 %v962, 4294901760
    %v964 = vsub.f32 %v962, %v963
    %v965 = vand.u32 %v964, 4294901760
    %966 = vmatpush.msra.mxu0 %v965
    %v967 = vand.u32 %v122, 4294901760
    %v968 = vsub.f32 %v122, %v967
    %v969 = vand.u32 %v968, 4294901760
    %v970 = vsub.f32 %v968, %v969
    %v971 = vand.u32 %v970, 4294901760
    %972 = vmatpush.msra.mxu0 %v971
    %v973 = vand.u32 %v121, 4294901760
    %v974 = vsub.f32 %v121, %v973
    %v975 = vand.u32 %v974, 4294901760
    %v976 = vsub.f32 %v974, %v975
    %v977 = vand.u32 %v976, 4294901760
    %978 = vmatpush.msra.mxu0 %v977
    %v979 = vand.u32 %v120, 4294901760
    %v980 = vsub.f32 %v120, %v979
    %v981 = vand.u32 %v980, 4294901760
    %v982 = vsub.f32 %v980, %v981
    %v983 = vand.u32 %v982, 4294901760
    %984 = vmatpush.msra.mxu0 %v983
    %v985 = vand.u32 %v119, 4294901760
    %v986 = vsub.f32 %v119, %v985
    %v987 = vand.u32 %v986, 4294901760
    %v988 = vsub.f32 %v986, %v987
    %v989 = vand.u32 %v988, 4294901760
    %990 = vmatpush.msra.mxu0 %v989
    %v991 = vand.u32 %v118, 4294901760
    %v992 = vsub.f32 %v118, %v991
    %v993 = vand.u32 %v992, 4294901760
    %v994 = vsub.f32 %v992, %v993
    %v995 = vand.u32 %v994, 4294901760
    %996 = vmatpush.msra.mxu0 %v995
    %v997 = vand.u32 %v117, 4294901760
    %v998 = vsub.f32 %v117, %v997
    %v999 = vand.u32 %v998, 4294901760
    %v1000 = vsub.f32 %v998, %v999
    %v1001 = vand.u32 %v1000, 4294901760
    %1002 = vmatpush.msra.mxu0 %v1001
    %v1003 = vand.u32 %v116, 4294901760
    %v1004 = vsub.f32 %v116, %v1003
    %v1005 = vand.u32 %v1004, 4294901760
    %v1006 = vsub.f32 %v1004, %v1005
    %v1007 = vand.u32 %v1006, 4294901760
    %1008 = vmatpush.msra.mxu0 %v1007
    %v1009 = vand.u32 %v115, 4294901760
    %v1010 = vsub.f32 %v115, %v1009
    %v1011 = vand.u32 %v1010, 4294901760
    %v1012 = vsub.f32 %v1010, %v1011
    %v1013 = vand.u32 %v1012, 4294901760
    %1014 = vmatpush.msra.mxu0 %v1013
    %v1015 = vand.u32 %v114, 4294901760
    %v1016 = vsub.f32 %v114, %v1015
    %v1017 = vand.u32 %v1016, 4294901760
    %v1018 = vsub.f32 %v1016, %v1017
    %v1019 = vand.u32 %v1018, 4294901760
    %1020 = vmatpush.msra.mxu0 %v1019
    %v1021 = vand.u32 %v113, 4294901760
    %v1022 = vsub.f32 %v113, %v1021
    %v1023 = vand.u32 %v1022, 4294901760
    %v1024 = vsub.f32 %v1022, %v1023
    %v1025 = vand.u32 %v1024, 4294901760
    %1026 = vmatpush.msra.mxu0 %v1025
    %v1027 = vand.u32 %v112, 4294901760
    %v1028 = vsub.f32 %v112, %v1027
    %v1029 = vand.u32 %v1028, 4294901760
    %v1030 = vsub.f32 %v1028, %v1029
    %v1031 = vand.u32 %v1030, 4294901760
    %1032 = vmatpush.msra.mxu0 %v1031
    %v1033 = vand.u32 %v66, 4294901760
    %1034 = vmatmul.f32.gmra.mxu0 %v1033
    %v1035 = vpop.f32.mrf.mxu0
    %v1036 = vadd.f32 %v927, %v1035
    %v1037 = vand.u32 %v67, 4294901760
    %1038 = vmatmul.f32.gmra.mxu0 %v1037
    %v1039 = vpop.f32.mrf.mxu0
    %v1040 = vadd.f32 %v935, %v1039
    %1041 = vdwg.mxu0
    %v1042 = vand.u32 %v127, 4294901760
    %v1043 = vsub.f32 %v127, %v1042
    %1044 = vmatpush.msra.mxu0 %v1043
    %v1045 = vand.u32 %v126, 4294901760
    %v1046 = vsub.f32 %v126, %v1045
    %1047 = vmatpush.msra.mxu0 %v1046
    %v1048 = vand.u32 %v125, 4294901760
    %v1049 = vsub.f32 %v125, %v1048
    %1050 = vmatpush.msra.mxu0 %v1049
    %v1051 = vand.u32 %v124, 4294901760
    %v1052 = vsub.f32 %v124, %v1051
    %1053 = vmatpush.msra.mxu0 %v1052
    %v1054 = vand.u32 %v123, 4294901760
    %v1055 = vsub.f32 %v123, %v1054
    %1056 = vmatpush.msra.mxu0 %v1055
    %v1057 = vand.u32 %v122, 4294901760
    %v1058 = vsub.f32 %v122, %v1057
    %1059 = vmatpush.msra.mxu0 %v1058
    %v1060 = vand.u32 %v121, 4294901760
    %v1061 = vsub.f32 %v121, %v1060
    %1062 = vmatpush.msra.mxu0 %v1061
    %v1063 = vand.u32 %v120, 4294901760
    %v1064 = vsub.f32 %v120, %v1063
    %1065 = vmatpush.msra.mxu0 %v1064
    %v1066 = vand.u32 %v119, 4294901760
    %v1067 = vsub.f32 %v119, %v1066
    %1068 = vmatpush.msra.mxu0 %v1067
    %v1069 = vand.u32 %v118, 4294901760
    %v1070 = vsub.f32 %v118, %v1069
    %1071 = vmatpush.msra.mxu0 %v1070
    %v1072 = vand.u32 %v117, 4294901760
    %v1073 = vsub.f32 %v117, %v1072
    %1074 = vmatpush.msra.mxu0 %v1073
    %v1075 = vand.u32 %v116, 4294901760
    %v1076 = vsub.f32 %v116, %v1075
    %1077 = vmatpush.msra.mxu0 %v1076
    %v1078 = vand.u32 %v115, 4294901760
    %v1079 = vsub.f32 %v115, %v1078
    %1080 = vmatpush.msra.mxu0 %v1079
    %v1081 = vand.u32 %v114, 4294901760
    %v1082 = vsub.f32 %v114, %v1081
    %1083 = vmatpush.msra.mxu0 %v1082
    %v1084 = vand.u32 %v113, 4294901760
    %v1085 = vsub.f32 %v113, %v1084
    %1086 = vmatpush.msra.mxu0 %v1085
    %v1087 = vand.u32 %v112, 4294901760
    %v1088 = vsub.f32 %v112, %v1087
    %1089 = vmatpush.msra.mxu0 %v1088
    %v1090 = vand.u32 %v66, 4294901760
    %v1091 = vsub.f32 %v66, %v1090
    %1092 = vmatmul.f32.gmra.mxu0 %v1091
    %v1093 = vpop.f32.mrf.mxu0
    %v1094 = vadd.f32 %v1036, %v1093
    %v1095 = vand.u32 %v67, 4294901760
    %v1096 = vsub.f32 %v67, %v1095
    %1097 = vmatmul.f32.gmra.mxu0 %v1096
    %v1098 = vpop.f32.mrf.mxu0
    %v1099 = vadd.f32 %v1040, %v1098
    %1100 = vdwg.mxu0
    %v1101 = vand.u32 %v127, 4294901760
    %1102 = vmatpush.msra.mxu0 %v1101
    %v1103 = vand.u32 %v126, 4294901760
    %1104 = vmatpush.msra.mxu0 %v1103
    %v1105 = vand.u32 %v125, 4294901760
    %1106 = vmatpush.msra.mxu0 %v1105
    %v1107 = vand.u32 %v124, 4294901760
    %1108 = vmatpush.msra.mxu0 %v1107
    %v1109 = vand.u32 %v123, 4294901760
    %1110 = vmatpush.msra.mxu0 %v1109
    %v1111 = vand.u32 %v122, 4294901760
    %1112 = vmatpush.msra.mxu0 %v1111
    %v1113 = vand.u32 %v121, 4294901760
    %1114 = vmatpush.msra.mxu0 %v1113
    %v1115 = vand.u32 %v120, 4294901760
    %1116 = vmatpush.msra.mxu0 %v1115
    %v1117 = vand.u32 %v119, 4294901760
    %1118 = vmatpush.msra.mxu0 %v1117
    %v1119 = vand.u32 %v118, 4294901760
    %1120 = vmatpush.msra.mxu0 %v1119
    %v1121 = vand.u32 %v117, 4294901760
    %1122 = vmatpush.msra.mxu0 %v1121
    %v1123 = vand.u32 %v116, 4294901760
    %1124 = vmatpush.msra.mxu0 %v1123
    %v1125 = vand.u32 %v115, 4294901760
    %1126 = vmatpush.msra.mxu0 %v1125
    %v1127 = vand.u32 %v114, 4294901760
    %1128 = vmatpush.msra.mxu0 %v1127
    %v1129 = vand.u32 %v113, 4294901760
    %1130 = vmatpush.msra.mxu0 %v1129
    %v1131 = vand.u32 %v112, 4294901760
    %1132 = vmatpush.msra.mxu0 %v1131
    %v1133 = vand.u32 %v66, 4294901760
    %v1134 = vsub.f32 %v66, %v1133
    %v1135 = vand.u32 %v1134, 4294901760
    %1136 = vmatmul.f32.gmra.mxu0 %v1135
    %v1137 = vpop.f32.mrf.mxu0
    %v1138 = vadd.f32 %v1094, %v1137
    %v1139 = vand.u32 %v67, 4294901760
    %v1140 = vsub.f32 %v67, %v1139
    %v1141 = vand.u32 %v1140, 4294901760
    %1142 = vmatmul.f32.gmra.mxu0 %v1141
    %v1143 = vpop.f32.mrf.mxu0
    %v1144 = vadd.f32 %v1099, %v1143
    %1145 = vdwg.mxu0
    %v1146 = vand.u32 %v127, 4294901760
    %v1147 = vsub.f32 %v127, %v1146
    %v1148 = vand.u32 %v1147, 4294901760
    %1149 = vmatpush.msra.mxu0 %v1148
    %v1150 = vand.u32 %v126, 4294901760
    %v1151 = vsub.f32 %v126, %v1150
    %v1152 = vand.u32 %v1151, 4294901760
    %1153 = vmatpush.msra.mxu0 %v1152
    %v1154 = vand.u32 %v125, 4294901760
    %v1155 = vsub.f32 %v125, %v1154
    %v1156 = vand.u32 %v1155, 4294901760
    %1157 = vmatpush.msra.mxu0 %v1156
    %v1158 = vand.u32 %v124, 4294901760
    %v1159 = vsub.f32 %v124, %v1158
    %v1160 = vand.u32 %v1159, 4294901760
    %1161 = vmatpush.msra.mxu0 %v1160
    %v1162 = vand.u32 %v123, 4294901760
    %v1163 = vsub.f32 %v123, %v1162
    %v1164 = vand.u32 %v1163, 4294901760
    %1165 = vmatpush.msra.mxu0 %v1164
    %v1166 = vand.u32 %v122, 4294901760
    %v1167 = vsub.f32 %v122, %v1166
    %v1168 = vand.u32 %v1167, 4294901760
    %1169 = vmatpush.msra.mxu0 %v1168
    %v1170 = vand.u32 %v121, 4294901760
    %v1171 = vsub.f32 %v121, %v1170
    %v1172 = vand.u32 %v1171, 4294901760
    %1173 = vmatpush.msra.mxu0 %v1172
    %v1174 = vand.u32 %v120, 4294901760
    %v1175 = vsub.f32 %v120, %v1174
    %v1176 = vand.u32 %v1175, 4294901760
    %1177 = vmatpush.msra.mxu0 %v1176
    %v1178 = vand.u32 %v119, 4294901760
    %v1179 = vsub.f32 %v119, %v1178
    %v1180 = vand.u32 %v1179, 4294901760
    %1181 = vmatpush.msra.mxu0 %v1180
    %v1182 = vand.u32 %v118, 4294901760
    %v1183 = vsub.f32 %v118, %v1182
    %v1184 = vand.u32 %v1183, 4294901760
    %1185 = vmatpush.msra.mxu0 %v1184
    %v1186 = vand.u32 %v117, 4294901760
    %v1187 = vsub.f32 %v117, %v1186
    %v1188 = vand.u32 %v1187, 4294901760
    %1189 = vmatpush.msra.mxu0 %v1188
    %v1190 = vand.u32 %v116, 4294901760
    %v1191 = vsub.f32 %v116, %v1190
    %v1192 = vand.u32 %v1191, 4294901760
    %1193 = vmatpush.msra.mxu0 %v1192
    %v1194 = vand.u32 %v115, 4294901760
    %v1195 = vsub.f32 %v115, %v1194
    %v1196 = vand.u32 %v1195, 4294901760
    %1197 = vmatpush.msra.mxu0 %v1196
    %v1198 = vand.u32 %v114, 4294901760
    %v1199 = vsub.f32 %v114, %v1198
    %v1200 = vand.u32 %v1199, 4294901760
    %1201 = vmatpush.msra.mxu0 %v1200
    %v1202 = vand.u32 %v113, 4294901760
    %v1203 = vsub.f32 %v113, %v1202
    %v1204 = vand.u32 %v1203, 4294901760
    %1205 = vmatpush.msra.mxu0 %v1204
    %v1206 = vand.u32 %v112, 4294901760
    %v1207 = vsub.f32 %v112, %v1206
    %v1208 = vand.u32 %v1207, 4294901760
    %1209 = vmatpush.msra.mxu0 %v1208
    %v1210 = vand.u32 %v66, 4294901760
    %1211 = vmatmul.f32.gmra.mxu0 %v1210
    %v1212 = vpop.f32.mrf.mxu0
    %v1213 = vadd.f32 %v1138, %v1212
    %v1214 = vand.u32 %v67, 4294901760
    %1215 = vmatmul.f32.gmra.mxu0 %v1214
    %v1216 = vpop.f32.mrf.mxu0
    %v1217 = vadd.f32 %v1144, %v1216
    %1218 = vdwg.mxu0
    %v1219 = vand.u32 %v127, 4294901760
    %1220 = vmatpush.msra.mxu0 %v1219
    %v1221 = vand.u32 %v126, 4294901760
    %1222 = vmatpush.msra.mxu0 %v1221
    %v1223 = vand.u32 %v125, 4294901760
    %1224 = vmatpush.msra.mxu0 %v1223
    %v1225 = vand.u32 %v124, 4294901760
    %1226 = vmatpush.msra.mxu0 %v1225
    %v1227 = vand.u32 %v123, 4294901760
    %1228 = vmatpush.msra.mxu0 %v1227
    %v1229 = vand.u32 %v122, 4294901760
    %1230 = vmatpush.msra.mxu0 %v1229
    %v1231 = vand.u32 %v121, 4294901760
    %1232 = vmatpush.msra.mxu0 %v1231
    %v1233 = vand.u32 %v120, 4294901760
    %1234 = vmatpush.msra.mxu0 %v1233
    %v1235 = vand.u32 %v119, 4294901760
    %1236 = vmatpush.msra.mxu0 %v1235
    %v1237 = vand.u32 %v118, 4294901760
    %1238 = vmatpush.msra.mxu0 %v1237
    %v1239 = vand.u32 %v117, 4294901760
    %1240 = vmatpush.msra.mxu0 %v1239
    %v1241 = vand.u32 %v116, 4294901760
    %1242 = vmatpush.msra.mxu0 %v1241
    %v1243 = vand.u32 %v115, 4294901760
    %1244 = vmatpush.msra.mxu0 %v1243
    %v1245 = vand.u32 %v114, 4294901760
    %1246 = vmatpush.msra.mxu0 %v1245
    %v1247 = vand.u32 %v113, 4294901760
    %1248 = vmatpush.msra.mxu0 %v1247
    %v1249 = vand.u32 %v112, 4294901760
    %1250 = vmatpush.msra.mxu0 %v1249
    %v1251 = vand.u32 %v66, 4294901760
    %1252 = vmatmul.f32.gmra.mxu0 %v1251
    %v1253 = vpop.f32.mrf.mxu0
    %v1254 = vadd.f32 %v1213, %v1253
    %v1255 = vand.u32 %v67, 4294901760
    %1256 = vmatmul.f32.gmra.mxu0 %v1255
    %v1257 = vpop.f32.mrf.mxu0
    %v1258 = vadd.f32 %v1217, %v1257
    %1259 = vdwg.mxu0
    %v1260 = vand.u32 %v143, 4294901760
    %1261 = vmatpush.msra.mxu0 %v1260
    %v1262 = vand.u32 %v142, 4294901760
    %1263 = vmatpush.msra.mxu0 %v1262
    %v1264 = vand.u32 %v141, 4294901760
    %1265 = vmatpush.msra.mxu0 %v1264
    %v1266 = vand.u32 %v140, 4294901760
    %1267 = vmatpush.msra.mxu0 %v1266
    %v1268 = vand.u32 %v139, 4294901760
    %1269 = vmatpush.msra.mxu0 %v1268
    %v1270 = vand.u32 %v138, 4294901760
    %1271 = vmatpush.msra.mxu0 %v1270
    %v1272 = vand.u32 %v137, 4294901760
    %1273 = vmatpush.msra.mxu0 %v1272
    %v1274 = vand.u32 %v136, 4294901760
    %1275 = vmatpush.msra.mxu0 %v1274
    %v1276 = vand.u32 %v135, 4294901760
    %1277 = vmatpush.msra.mxu0 %v1276
    %v1278 = vand.u32 %v134, 4294901760
    %1279 = vmatpush.msra.mxu0 %v1278
    %v1280 = vand.u32 %v133, 4294901760
    %1281 = vmatpush.msra.mxu0 %v1280
    %v1282 = vand.u32 %v132, 4294901760
    %1283 = vmatpush.msra.mxu0 %v1282
    %v1284 = vand.u32 %v131, 4294901760
    %1285 = vmatpush.msra.mxu0 %v1284
    %v1286 = vand.u32 %v130, 4294901760
    %1287 = vmatpush.msra.mxu0 %v1286
    %v1288 = vand.u32 %v129, 4294901760
    %1289 = vmatpush.msra.mxu0 %v1288
    %v1290 = vand.u32 %v128, 4294901760
    %1291 = vmatpush.msra.mxu0 %v1290
    %v1292 = vand.u32 %v78, 4294901760
    %v1293 = vsub.f32 %v78, %v1292
    %v1294 = vand.u32 %v1293, 4294901760
    %v1295 = vsub.f32 %v1293, %v1294
    %v1296 = vand.u32 %v1295, 4294901760
    %1297 = vmatmul.f32.gmra.mxu0 %v1296
    %v1298 = vpop.f32.mrf.mxu0
    %v1299 = vadd.f32 %v1254, %v1298
    %v1300 = vand.u32 %v79, 4294901760
    %v1301 = vsub.f32 %v79, %v1300
    %v1302 = vand.u32 %v1301, 4294901760
    %v1303 = vsub.f32 %v1301, %v1302
    %v1304 = vand.u32 %v1303, 4294901760
    %1305 = vmatmul.f32.gmra.mxu0 %v1304
    %v1306 = vpop.f32.mrf.mxu0
    %v1307 = vadd.f32 %v1258, %v1306
    %1308 = vdwg.mxu0
    %v1309 = vand.u32 %v143, 4294901760
    %v1310 = vsub.f32 %v143, %v1309
    %v1311 = vand.u32 %v1310, 4294901760
    %v1312 = vsub.f32 %v1310, %v1311
    %v1313 = vand.u32 %v1312, 4294901760
    %1314 = vmatpush.msra.mxu0 %v1313
    %v1315 = vand.u32 %v142, 4294901760
    %v1316 = vsub.f32 %v142, %v1315
    %v1317 = vand.u32 %v1316, 4294901760
    %v1318 = vsub.f32 %v1316, %v1317
    %v1319 = vand.u32 %v1318, 4294901760
    %1320 = vmatpush.msra.mxu0 %v1319
    %v1321 = vand.u32 %v141, 4294901760
    %v1322 = vsub.f32 %v141, %v1321
    %v1323 = vand.u32 %v1322, 4294901760
    %v1324 = vsub.f32 %v1322, %v1323
    %v1325 = vand.u32 %v1324, 4294901760
    %1326 = vmatpush.msra.mxu0 %v1325
    %v1327 = vand.u32 %v140, 4294901760
    %v1328 = vsub.f32 %v140, %v1327
    %v1329 = vand.u32 %v1328, 4294901760
    %v1330 = vsub.f32 %v1328, %v1329
    %v1331 = vand.u32 %v1330, 4294901760
    %1332 = vmatpush.msra.mxu0 %v1331
    %v1333 = vand.u32 %v139, 4294901760
    %v1334 = vsub.f32 %v139, %v1333
    %v1335 = vand.u32 %v1334, 4294901760
    %v1336 = vsub.f32 %v1334, %v1335
    %v1337 = vand.u32 %v1336, 4294901760
    %1338 = vmatpush.msra.mxu0 %v1337
    %v1339 = vand.u32 %v138, 4294901760
    %v1340 = vsub.f32 %v138, %v1339
    %v1341 = vand.u32 %v1340, 4294901760
    %v1342 = vsub.f32 %v1340, %v1341
    %v1343 = vand.u32 %v1342, 4294901760
    %1344 = vmatpush.msra.mxu0 %v1343
    %v1345 = vand.u32 %v137, 4294901760
    %v1346 = vsub.f32 %v137, %v1345
    %v1347 = vand.u32 %v1346, 4294901760
    %v1348 = vsub.f32 %v1346, %v1347
    %v1349 = vand.u32 %v1348, 4294901760
    %1350 = vmatpush.msra.mxu0 %v1349
    %v1351 = vand.u32 %v136, 4294901760
    %v1352 = vsub.f32 %v136, %v1351
    %v1353 = vand.u32 %v1352, 4294901760
    %v1354 = vsub.f32 %v1352, %v1353
    %v1355 = vand.u32 %v1354, 4294901760
    %1356 = vmatpush.msra.mxu0 %v1355
    %v1357 = vand.u32 %v135, 4294901760
    %v1358 = vsub.f32 %v135, %v1357
    %v1359 = vand.u32 %v1358, 4294901760
    %v1360 = vsub.f32 %v1358, %v1359
    %v1361 = vand.u32 %v1360, 4294901760
    %1362 = vmatpush.msra.mxu0 %v1361
    %v1363 = vand.u32 %v134, 4294901760
    %v1364 = vsub.f32 %v134, %v1363
    %v1365 = vand.u32 %v1364, 4294901760
    %v1366 = vsub.f32 %v1364, %v1365
    %v1367 = vand.u32 %v1366, 4294901760
    %1368 = vmatpush.msra.mxu0 %v1367
    %v1369 = vand.u32 %v133, 4294901760
    %v1370 = vsub.f32 %v133, %v1369
    %v1371 = vand.u32 %v1370, 4294901760
    %v1372 = vsub.f32 %v1370, %v1371
    %v1373 = vand.u32 %v1372, 4294901760
    %1374 = vmatpush.msra.mxu0 %v1373
    %v1375 = vand.u32 %v132, 4294901760
    %v1376 = vsub.f32 %v132, %v1375
    %v1377 = vand.u32 %v1376, 4294901760
    %v1378 = vsub.f32 %v1376, %v1377
    %v1379 = vand.u32 %v1378, 4294901760
    %1380 = vmatpush.msra.mxu0 %v1379
    %v1381 = vand.u32 %v131, 4294901760
    %v1382 = vsub.f32 %v131, %v1381
    %v1383 = vand.u32 %v1382, 4294901760
    %v1384 = vsub.f32 %v1382, %v1383
    %v1385 = vand.u32 %v1384, 4294901760
    %1386 = vmatpush.msra.mxu0 %v1385
    %v1387 = vand.u32 %v130, 4294901760
    %v1388 = vsub.f32 %v130, %v1387
    %v1389 = vand.u32 %v1388, 4294901760
    %v1390 = vsub.f32 %v1388, %v1389
    %v1391 = vand.u32 %v1390, 4294901760
    %1392 = vmatpush.msra.mxu0 %v1391
    %v1393 = vand.u32 %v129, 4294901760
    %v1394 = vsub.f32 %v129, %v1393
    %v1395 = vand.u32 %v1394, 4294901760
    %v1396 = vsub.f32 %v1394, %v1395
    %v1397 = vand.u32 %v1396, 4294901760
    %1398 = vmatpush.msra.mxu0 %v1397
    %v1399 = vand.u32 %v128, 4294901760
    %v1400 = vsub.f32 %v128, %v1399
    %v1401 = vand.u32 %v1400, 4294901760
    %v1402 = vsub.f32 %v1400, %v1401
    %v1403 = vand.u32 %v1402, 4294901760
    %1404 = vmatpush.msra.mxu0 %v1403
    %v1405 = vand.u32 %v78, 4294901760
    %1406 = vmatmul.f32.gmra.mxu0 %v1405
    %v1407 = vpop.f32.mrf.mxu0
    %v1408 = vadd.f32 %v1299, %v1407
    %v1409 = vand.u32 %v79, 4294901760
    %1410 = vmatmul.f32.gmra.mxu0 %v1409
    %v1411 = vpop.f32.mrf.mxu0
    %v1412 = vadd.f32 %v1307, %v1411
    %1413 = vdwg.mxu0
    %v1414 = vand.u32 %v143, 4294901760
    %v1415 = vsub.f32 %v143, %v1414
    %1416 = vmatpush.msra.mxu0 %v1415
    %v1417 = vand.u32 %v142, 4294901760
    %v1418 = vsub.f32 %v142, %v1417
    %1419 = vmatpush.msra.mxu0 %v1418
    %v1420 = vand.u32 %v141, 4294901760
    %v1421 = vsub.f32 %v141, %v1420
    %1422 = vmatpush.msra.mxu0 %v1421
    %v1423 = vand.u32 %v140, 4294901760
    %v1424 = vsub.f32 %v140, %v1423
    %1425 = vmatpush.msra.mxu0 %v1424
    %v1426 = vand.u32 %v139, 4294901760
    %v1427 = vsub.f32 %v139, %v1426
    %1428 = vmatpush.msra.mxu0 %v1427
    %v1429 = vand.u32 %v138, 4294901760
    %v1430 = vsub.f32 %v138, %v1429
    %1431 = vmatpush.msra.mxu0 %v1430
    %v1432 = vand.u32 %v137, 4294901760
    %v1433 = vsub.f32 %v137, %v1432
    %1434 = vmatpush.msra.mxu0 %v1433
    %v1435 = vand.u32 %v136, 4294901760
    %v1436 = vsub.f32 %v136, %v1435
    %1437 = vmatpush.msra.mxu0 %v1436
    %v1438 = vand.u32 %v135, 4294901760
    %v1439 = vsub.f32 %v135, %v1438
    %1440 = vmatpush.msra.mxu0 %v1439
    %v1441 = vand.u32 %v134, 4294901760
    %v1442 = vsub.f32 %v134, %v1441
    %1443 = vmatpush.msra.mxu0 %v1442
    %v1444 = vand.u32 %v133, 4294901760
    %v1445 = vsub.f32 %v133, %v1444
    %1446 = vmatpush.msra.mxu0 %v1445
    %v1447 = vand.u32 %v132, 4294901760
    %v1448 = vsub.f32 %v132, %v1447
    %1449 = vmatpush.msra.mxu0 %v1448
    %v1450 = vand.u32 %v131, 4294901760
    %v1451 = vsub.f32 %v131, %v1450
    %1452 = vmatpush.msra.mxu0 %v1451
    %v1453 = vand.u32 %v130, 4294901760
    %v1454 = vsub.f32 %v130, %v1453
    %1455 = vmatpush.msra.mxu0 %v1454
    %v1456 = vand.u32 %v129, 4294901760
    %v1457 = vsub.f32 %v129, %v1456
    %1458 = vmatpush.msra.mxu0 %v1457
    %v1459 = vand.u32 %v128, 4294901760
    %v1460 = vsub.f32 %v128, %v1459
    %1461 = vmatpush.msra.mxu0 %v1460
    %v1462 = vand.u32 %v78, 4294901760
    %v1463 = vsub.f32 %v78, %v1462
    %1464 = vmatmul.f32.gmra.mxu0 %v1463
    %v1465 = vpop.f32.mrf.mxu0
    %v1466 = vadd.f32 %v1408, %v1465
    %v1467 = vand.u32 %v79, 4294901760
    %v1468 = vsub.f32 %v79, %v1467
    %1469 = vmatmul.f32.gmra.mxu0 %v1468
    %v1470 = vpop.f32.mrf.mxu0
    %v1471 = vadd.f32 %v1412, %v1470
    %1472 = vdwg.mxu0
    %v1473 = vand.u32 %v143, 4294901760
    %1474 = vmatpush.msra.mxu0 %v1473
    %v1475 = vand.u32 %v142, 4294901760
    %1476 = vmatpush.msra.mxu0 %v1475
    %v1477 = vand.u32 %v141, 4294901760
    %1478 = vmatpush.msra.mxu0 %v1477
    %v1479 = vand.u32 %v140, 4294901760
    %1480 = vmatpush.msra.mxu0 %v1479
    %v1481 = vand.u32 %v139, 4294901760
    %1482 = vmatpush.msra.mxu0 %v1481
    %v1483 = vand.u32 %v138, 4294901760
    %1484 = vmatpush.msra.mxu0 %v1483
    %v1485 = vand.u32 %v137, 4294901760
    %1486 = vmatpush.msra.mxu0 %v1485
    %v1487 = vand.u32 %v136, 4294901760
    %1488 = vmatpush.msra.mxu0 %v1487
    %v1489 = vand.u32 %v135, 4294901760
    %1490 = vmatpush.msra.mxu0 %v1489
    %v1491 = vand.u32 %v134, 4294901760
    %1492 = vmatpush.msra.mxu0 %v1491
    %v1493 = vand.u32 %v133, 4294901760
    %1494 = vmatpush.msra.mxu0 %v1493
    %v1495 = vand.u32 %v132, 4294901760
    %1496 = vmatpush.msra.mxu0 %v1495
    %v1497 = vand.u32 %v131, 4294901760
    %1498 = vmatpush.msra.mxu0 %v1497
    %v1499 = vand.u32 %v130, 4294901760
    %1500 = vmatpush.msra.mxu0 %v1499
    %v1501 = vand.u32 %v129, 4294901760
    %1502 = vmatpush.msra.mxu0 %v1501
    %v1503 = vand.u32 %v128, 4294901760
    %1504 = vmatpush.msra.mxu0 %v1503
    %v1505 = vand.u32 %v78, 4294901760
    %v1506 = vsub.f32 %v78, %v1505
    %v1507 = vand.u32 %v1506, 4294901760
    %1508 = vmatmul.f32.gmra.mxu0 %v1507
    %v1509 = vpop.f32.mrf.mxu0
    %v1510 = vadd.f32 %v1466, %v1509
    %v1511 = vand.u32 %v79, 4294901760
    %v1512 = vsub.f32 %v79, %v1511
    %v1513 = vand.u32 %v1512, 4294901760
    %1514 = vmatmul.f32.gmra.mxu0 %v1513
    %v1515 = vpop.f32.mrf.mxu0
    %v1516 = vadd.f32 %v1471, %v1515
    %1517 = vdwg.mxu0
    %v1518 = vand.u32 %v143, 4294901760
    %v1519 = vsub.f32 %v143, %v1518
    %v1520 = vand.u32 %v1519, 4294901760
    %1521 = vmatpush.msra.mxu0 %v1520
    %v1522 = vand.u32 %v142, 4294901760
    %v1523 = vsub.f32 %v142, %v1522
    %v1524 = vand.u32 %v1523, 4294901760
    %1525 = vmatpush.msra.mxu0 %v1524
    %v1526 = vand.u32 %v141, 4294901760
    %v1527 = vsub.f32 %v141, %v1526
    %v1528 = vand.u32 %v1527, 4294901760
    %1529 = vmatpush.msra.mxu0 %v1528
    %v1530 = vand.u32 %v140, 4294901760
    %v1531 = vsub.f32 %v140, %v1530
    %v1532 = vand.u32 %v1531, 4294901760
    %1533 = vmatpush.msra.mxu0 %v1532
    %v1534 = vand.u32 %v139, 4294901760
    %v1535 = vsub.f32 %v139, %v1534
    %v1536 = vand.u32 %v1535, 4294901760
    %1537 = vmatpush.msra.mxu0 %v1536
    %v1538 = vand.u32 %v138, 4294901760
    %v1539 = vsub.f32 %v138, %v1538
    %v1540 = vand.u32 %v1539, 4294901760
    %1541 = vmatpush.msra.mxu0 %v1540
    %v1542 = vand.u32 %v137, 4294901760
    %v1543 = vsub.f32 %v137, %v1542
    %v1544 = vand.u32 %v1543, 4294901760
    %1545 = vmatpush.msra.mxu0 %v1544
    %v1546 = vand.u32 %v136, 4294901760
    %v1547 = vsub.f32 %v136, %v1546
    %v1548 = vand.u32 %v1547, 4294901760
    %1549 = vmatpush.msra.mxu0 %v1548
    %v1550 = vand.u32 %v135, 4294901760
    %v1551 = vsub.f32 %v135, %v1550
    %v1552 = vand.u32 %v1551, 4294901760
    %1553 = vmatpush.msra.mxu0 %v1552
    %v1554 = vand.u32 %v134, 4294901760
    %v1555 = vsub.f32 %v134, %v1554
    %v1556 = vand.u32 %v1555, 4294901760
    %1557 = vmatpush.msra.mxu0 %v1556
    %v1558 = vand.u32 %v133, 4294901760
    %v1559 = vsub.f32 %v133, %v1558
    %v1560 = vand.u32 %v1559, 4294901760
    %1561 = vmatpush.msra.mxu0 %v1560
    %v1562 = vand.u32 %v132, 4294901760
    %v1563 = vsub.f32 %v132, %v1562
    %v1564 = vand.u32 %v1563, 4294901760
    %1565 = vmatpush.msra.mxu0 %v1564
    %v1566 = vand.u32 %v131, 4294901760
    %v1567 = vsub.f32 %v131, %v1566
    %v1568 = vand.u32 %v1567, 4294901760
    %1569 = vmatpush.msra.mxu0 %v1568
    %v1570 = vand.u32 %v130, 4294901760
    %v1571 = vsub.f32 %v130, %v1570
    %v1572 = vand.u32 %v1571, 4294901760
    %1573 = vmatpush.msra.mxu0 %v1572
    %v1574 = vand.u32 %v129, 4294901760
    %v1575 = vsub.f32 %v129, %v1574
    %v1576 = vand.u32 %v1575, 4294901760
    %1577 = vmatpush.msra.mxu0 %v1576
    %v1578 = vand.u32 %v128, 4294901760
    %v1579 = vsub.f32 %v128, %v1578
    %v1580 = vand.u32 %v1579, 4294901760
    %1581 = vmatpush.msra.mxu0 %v1580
    %v1582 = vand.u32 %v78, 4294901760
    %1583 = vmatmul.f32.gmra.mxu0 %v1582
    %v1584 = vpop.f32.mrf.mxu0
    %v1585 = vadd.f32 %v1510, %v1584
    %v1586 = vand.u32 %v79, 4294901760
    %1587 = vmatmul.f32.gmra.mxu0 %v1586
    %v1588 = vpop.f32.mrf.mxu0
    %v1589 = vadd.f32 %v1516, %v1588
    %1590 = vdwg.mxu0
    %v1591 = vand.u32 %v143, 4294901760
    %1592 = vmatpush.msra.mxu0 %v1591
    %v1593 = vand.u32 %v142, 4294901760
    %1594 = vmatpush.msra.mxu0 %v1593
    %v1595 = vand.u32 %v141, 4294901760
    %1596 = vmatpush.msra.mxu0 %v1595
    %v1597 = vand.u32 %v140, 4294901760
    %1598 = vmatpush.msra.mxu0 %v1597
    %v1599 = vand.u32 %v139, 4294901760
    %1600 = vmatpush.msra.mxu0 %v1599
    %v1601 = vand.u32 %v138, 4294901760
    %1602 = vmatpush.msra.mxu0 %v1601
    %v1603 = vand.u32 %v137, 4294901760
    %1604 = vmatpush.msra.mxu0 %v1603
    %v1605 = vand.u32 %v136, 4294901760
    %1606 = vmatpush.msra.mxu0 %v1605
    %v1607 = vand.u32 %v135, 4294901760
    %1608 = vmatpush.msra.mxu0 %v1607
    %v1609 = vand.u32 %v134, 4294901760
    %1610 = vmatpush.msra.mxu0 %v1609
    %v1611 = vand.u32 %v133, 4294901760
    %1612 = vmatpush.msra.mxu0 %v1611
    %v1613 = vand.u32 %v132, 4294901760
    %1614 = vmatpush.msra.mxu0 %v1613
    %v1615 = vand.u32 %v131, 4294901760
    %1616 = vmatpush.msra.mxu0 %v1615
    %v1617 = vand.u32 %v130, 4294901760
    %1618 = vmatpush.msra.mxu0 %v1617
    %v1619 = vand.u32 %v129, 4294901760
    %1620 = vmatpush.msra.mxu0 %v1619
    %v1621 = vand.u32 %v128, 4294901760
    %1622 = vmatpush.msra.mxu0 %v1621
    %v1623 = vand.u32 %v78, 4294901760
    %1624 = vmatmul.f32.gmra.mxu0 %v1623
    %v1625 = vpop.f32.mrf.mxu0
    %v1626 = vadd.f32 %v1585, %v1625
    %v1627 = vand.u32 %v79, 4294901760
    %1628 = vmatmul.f32.gmra.mxu0 %v1627
    %v1629 = vpop.f32.mrf.mxu0
    %v1630 = vadd.f32 %v1589, %v1629
    %1631 = vdwg.mxu0
    %1632 = vst [vmem:[#allocation5] sm:$0xff] %v1626
    %1633 = vst [vmem:[#allocation5 + $0x8] sm:$0xff] %v1630
    // Predicated region
    $region14: #{tpu_custom_call.1} parent=1 // pred_check
      _
    $region15: #{tpu_custom_call.1} parent=1 // pred_check_branch
      %1635 = sbr.rel (0) target = $region17
    $region16: #{tpu_custom_call.1} parent=1 // pred_region
      %1637 = vsyncadd [#allocation4], 0
      %s1638 = sshll.u32 [#allocation5], 4
      %s1639 = int_to_ptr.vmem [resolvable:$true] %s1638
      %s1640 = sshll.u32 %s2, 4
      %s1641 = int_to_ptr.hbm [resolvable:$true] %s1640
      %1646 = dma.vmem_to_hbm [thread:$0]  %s1639, 256, %s1641, [#allocation4], 128, 128, 8
    $region17: #{tpu_custom_call.1} parent=1 // pred_fallthru
      _
    // Predicated region
    $region18: #{tpu_custom_call.1} parent=1 // pred_check
      _
    $region19: #{tpu_custom_call.1} parent=1 // pred_check_branch
      %1648 = sbr.rel (0) target = $region21
    $region20: #{tpu_custom_call.1} parent=1 // pred_region
      %1650 = dma.done [#allocation4], 256
    $region21: #{tpu_custom_call.1} parent=1 // pred_fallthru
      _
    %1651 = vsyncpa [#allocation3], 1
    %1652 = vsyncpa [#allocation4], 1

</llo_original>
